<compile_context>
chip_gen: v7x
topology: tpu7x:2x2x1
jax: 0.10.0
libtpu: 0.0.40
codegen_flags: <defaults>
</compile_context>

<pallas_src>
import jax
import jax.numpy as jnp
from jax.experimental import pallas as pl
from jax.experimental.pallas import tpu as pltpu


def ffn_kernel(x_ref, w1_ref, b1_ref, w2_ref, b2_ref, g_ref, beta_ref, o_ref):
    # x_ref: (TR, D)  w1_ref: (D, F) bf16  b1_ref: (1, F) f32
    # w2_ref: (F, D) bf16  b2_ref/g_ref/beta_ref: (1, D) f32
    x32 = x_ref[...].astype(jnp.float32)      # f32 copy for residual / LayerNorm
    xb = x_ref[...].astype(jnp.bfloat16)      # bf16 MXU operand

    # w2(relu(w1(x)))  -- 1x1 Conv1d == per-token linear.
    # bf16 x bf16 matmuls with f32 accumulation (native MXU path).
    h = jnp.dot(xb, w1_ref[...], preferred_element_type=jnp.float32)
    h = jnp.maximum(h + b1_ref[...], 0.0)
    y = jnp.dot(h.astype(jnp.bfloat16), w2_ref[...],
                preferred_element_type=jnp.float32)
    y = y + b2_ref[...]

    # dropout(p=0.0) is the identity (eval semantics).
    # residual + LayerNorm over model_dim (eps = 1e-5, PyTorch default), in f32.
    z = x32 + y
    mean = jnp.mean(z, axis=-1, keepdims=True)
    var = jnp.mean((z - mean) * (z - mean), axis=-1, keepdims=True)
    zn = (z - mean) * jax.lax.rsqrt(var + 1e-5)
    o_ref[...] = (zn * g_ref[...] + beta_ref[...]).astype(o_ref.dtype)


def positional_wise_ffn(x, w1, b1, w2, b2, gamma, beta, *, row_tile=256):
    """x: (B, L, D).  w1: (D, F), b1: (F,), w2: (F, D), b2: (D,), gamma/beta: (D,).

    NOTE: w1/w2 must already be transposed from PyTorch Conv1d's (out, in, 1)
    layout into plain (in, out) matmul operands.
    """
    B, L, D = x.shape
    F = w1.shape[1]
    assert w1.shape == (D, F) and w2.shape == (F, D)
    # Lane alignment: keep the GEMM / output last dims multiples of 128 so
    # stores are lane-dense and the MXU tiles are full.
    assert D % 128 == 0, "model_dim must be a multiple of 128 (pad upstream)"
    assert F % 128 == 0, "ffn_dim must be a multiple of 128 (pad upstream)"

    R = B * L
    R_pad = pl.cdiv(R, row_tile) * row_tile

    x2 = x.reshape(R, D)
    if R_pad != R:
        x2 = jnp.pad(x2, ((0, R_pad - R), (0, 0)))

    # Weights in bf16 (halves VMEM/DMA bytes, native MXU dtype); small
    # per-channel vectors stay f32.
    w1b = w1.astype(jnp.bfloat16)
    w2b = w2.astype(jnp.bfloat16)
    b1r = b1.reshape(1, F).astype(jnp.float32)
    b2r = b2.reshape(1, D).astype(jnp.float32)
    gr = gamma.reshape(1, D).astype(jnp.float32)
    br = beta.reshape(1, D).astype(jnp.float32)

    grid = (R_pad // row_tile,)
    out = pl.pallas_call(
        ffn_kernel,
        out_shape=jax.ShapeDtypeStruct((R_pad, D), x.dtype),
        grid_spec=pltpu.PrefetchScalarGridSpec(
            num_scalar_prefetch=0,
            grid=grid,
            in_specs=[
                pl.BlockSpec((row_tile, D), lambda i: (i, 0)),  # x rows (streamed)
                pl.BlockSpec((D, F), lambda i: (0, 0)),         # w1 (resident)
                pl.BlockSpec((1, F), lambda i: (0, 0)),         # b1 (resident)
                pl.BlockSpec((F, D), lambda i: (0, 0)),         # w2 (resident)
                pl.BlockSpec((1, D), lambda i: (0, 0)),         # b2 (resident)
                pl.BlockSpec((1, D), lambda i: (0, 0)),         # gamma (resident)
                pl.BlockSpec((1, D), lambda i: (0, 0)),         # beta (resident)
            ],
            out_specs=pl.BlockSpec((row_tile, D), lambda i: (i, 0)),
        ),
        compiler_params=pltpu.CompilerParams(
            dimension_semantics=("parallel",),       # megacore-shard the row axis
            vmem_limit_bytes=48 * 1024 * 1024,        # fits v5e/v6e/v7x
        ),
    )(x2, w1b, b1r, w2b, b2r, gr, br)

    if R_pad != R:
        out = out[:R]
    return out.reshape(B, L, D)


def reference(x, w1, b1, w2, b2, gamma, beta):
    """Mirrors the kernel's numerics: bf16 GEMM operands, f32 accumulate,
    f32 residual + LayerNorm."""
    xb = x.astype(jnp.bfloat16).astype(jnp.float32)
    w1b = w1.astype(jnp.bfloat16).astype(jnp.float32)
    w2b = w2.astype(jnp.bfloat16).astype(jnp.float32)
    h = jnp.maximum(jnp.einsum("bld,df->blf", xb, w1b) + b1, 0.0)
    hb = h.astype(jnp.bfloat16).astype(jnp.float32)
    y = jnp.einsum("blf,fd->bld", hb, w2b) + b2
    z = x + y
    mean = jnp.mean(z, axis=-1, keepdims=True)
    var = jnp.mean((z - mean) ** 2, axis=-1, keepdims=True)
    return (z - mean) * jax.lax.rsqrt(var + 1e-5) * gamma + beta


if __name__ == "__main__":
    # Small, lane-aligned shapes consistent with the module
    # (model_dim / ffn_dim scaled down but kept multiples of 128).
    B, L, D, F = 2, 256, 128, 256

    key = jax.random.PRNGKey(0)
    kx, k1, kb1, k2, kb2 = jax.random.split(key, 5)

    x = jax.random.normal(kx, (B, L, D), dtype=jnp.float32)

    # Conv1d(model_dim, ffn_dim, 1) weight is (ffn_dim, model_dim, 1);
    # here we store it directly as the matmul operand (model_dim, ffn_dim).
    w1 = jax.random.normal(k1, (D, F), dtype=jnp.float32) * 0.1
    b1 = jax.random.normal(kb1, (F,), dtype=jnp.float32) * 0.1
    w2 = jax.random.normal(k2, (F, D), dtype=jnp.float32) * 0.1
    b2 = jax.random.normal(kb2, (D,), dtype=jnp.float32) * 0.1
    # LayerNorm params (PyTorch default init: weight=1, bias=0)
    gamma = jnp.ones((D,), dtype=jnp.float32)
    beta = jnp.zeros((D,), dtype=jnp.float32)

    out = positional_wise_ffn(x, w1, b1, w2, b2, gamma, beta, row_tile=256)
    out = jax.block_until_ready(out)

    ref = reference(x, w1, b1, w2, b2, gamma, beta)
    assert out.shape == (B, L, D)
    assert bool(jnp.all(jnp.isfinite(out)))
    assert jnp.allclose(out, ref, atol=5e-3, rtol=5e-3)

    print("KERNEL_OK")
</pallas_src>

<mosaic_0001>
module attributes {stable_mosaic.version = 11 : i64} {
  func.func @ffn_kernel(%arg0: i32, %arg1: memref<256x128xf32, #tpu.memory_space<vmem>>, %arg2: memref<128x256xbf16, #tpu.memory_space<vmem>>, %arg3: memref<1x256xf32, #tpu.memory_space<vmem>>, %arg4: memref<256x128xbf16, #tpu.memory_space<vmem>>, %arg5: memref<1x128xf32, #tpu.memory_space<vmem>>, %arg6: memref<1x128xf32, #tpu.memory_space<vmem>>, %arg7: memref<1x128xf32, #tpu.memory_space<vmem>>, %arg8: memref<256x128xf32, #tpu.memory_space<vmem>>) attributes {dimension_semantics = [#tpu.dimension_semantics<parallel>], iteration_bounds = array<i64: 2>, scalar_prefetch = 0 : i64, scratch_operands = 0 : i64, tpu.core_type = #tpu.core_type<tc>, window_params = [{transform_indices = @transform_0, window_bounds = array<i64: 256, 128>}, {pipeline_mode = #tpu.pipeline_mode<synchronous>, transform_indices = @transform_1, window_bounds = array<i64: 128, 256>}, {pipeline_mode = #tpu.pipeline_mode<synchronous>, transform_indices = @transform_2, window_bounds = array<i64: 1, 256>}, {pipeline_mode = #tpu.pipeline_mode<synchronous>, transform_indices = @transform_3, window_bounds = array<i64: 256, 128>}, {pipeline_mode = #tpu.pipeline_mode<synchronous>, transform_indices = @transform_4, window_bounds = array<i64: 1, 128>}, {pipeline_mode = #tpu.pipeline_mode<synchronous>, transform_indices = @transform_5, window_bounds = array<i64: 1, 128>}, {pipeline_mode = #tpu.pipeline_mode<synchronous>, transform_indices = @transform_6, window_bounds = array<i64: 1, 128>}, {transform_indices = @transform_7, window_bounds = array<i64: 256, 128>}]} {
    %c0 = arith.constant 0 : index
    %c0_0 = arith.constant 0 : index
    %0 = vector.load %arg1[%c0, %c0_0] : memref<256x128xf32, #tpu.memory_space<vmem>>, vector<256x128xf32>
    %c0_1 = arith.constant 0 : index
    %c0_2 = arith.constant 0 : index
    %1 = vector.load %arg1[%c0_1, %c0_2] : memref<256x128xf32, #tpu.memory_space<vmem>>, vector<256x128xf32>
    %2 = arith.truncf %1 : vector<256x128xf32> to vector<256x128xbf16>
    %c0_3 = arith.constant 0 : index
    %c0_4 = arith.constant 0 : index
    %3 = vector.load %arg2[%c0_3, %c0_4] : memref<128x256xbf16, #tpu.memory_space<vmem>>, vector<128x256xbf16>
    %cst = arith.constant dense<0.000000e+00> : vector<256x256xf32>
    %4 = tpu.matmul %2, %3, %cst {dimension_numbers = #tpu.dot_dimension_numbers<[1], [0], [0], [1], [0, 0, 1, 1], [], []>} : vector<256x128xbf16>, vector<128x256xbf16>, vector<256x256xf32> -> vector<256x256xf32>
    %c0_5 = arith.constant 0 : index
    %c0_6 = arith.constant 0 : index
    %5 = vector.load %arg3[%c0_5, %c0_6] : memref<1x256xf32, #tpu.memory_space<vmem>>, vector<1x256xf32>
    %6 = vector.broadcast %5 : vector<1x256xf32> to vector<256x256xf32>
    %7 = arith.addf %4, %6 : vector<256x256xf32>
    %cst_7 = arith.constant 0.000000e+00 : f32
    %8 = vector.broadcast %cst_7 : f32 to vector<256x256xf32>
    %9 = arith.maximumf %7, %8 : vector<256x256xf32>
    %10 = arith.truncf %9 : vector<256x256xf32> to vector<256x256xbf16>
    %c0_8 = arith.constant 0 : index
    %c0_9 = arith.constant 0 : index
    %11 = vector.load %arg4[%c0_8, %c0_9] : memref<256x128xbf16, #tpu.memory_space<vmem>>, vector<256x128xbf16>
    %cst_10 = arith.constant dense<0.000000e+00> : vector<256x128xf32>
    %12 = tpu.matmul %10, %11, %cst_10 {dimension_numbers = #tpu.dot_dimension_numbers<[1], [0], [0], [1], [0, 0, 1, 1], [], []>} : vector<256x256xbf16>, vector<256x128xbf16>, vector<256x128xf32> -> vector<256x128xf32>
    %c0_11 = arith.constant 0 : index
    %c0_12 = arith.constant 0 : index
    %13 = vector.load %arg5[%c0_11, %c0_12] : memref<1x128xf32, #tpu.memory_space<vmem>>, vector<1x128xf32>
    %14 = vector.broadcast %13 : vector<1x128xf32> to vector<256x128xf32>
    %15 = arith.addf %12, %14 : vector<256x128xf32>
    %16 = arith.addf %0, %15 : vector<256x128xf32>
    %cst_13 = arith.constant dense<0.000000e+00> : vector<256xf32>
    %17 = vector.multi_reduction <add>, %16, %cst_13 [1] : vector<256x128xf32> to vector<256xf32>
    %18 = vector.shape_cast %17 : vector<256xf32> to vector<256x1xf32>
    %cst_14 = arith.constant 1.280000e+02 : f32
    %19 = vector.broadcast %cst_14 : f32 to vector<256x1xf32>
    %20 = arith.divf %18, %19 : vector<256x1xf32>
    %21 = vector.broadcast %20 : vector<256x1xf32> to vector<256x128xf32>
    %22 = arith.subf %16, %21 : vector<256x128xf32>
    %23 = vector.broadcast %20 : vector<256x1xf32> to vector<256x128xf32>
    %24 = arith.subf %16, %23 : vector<256x128xf32>
    %25 = arith.mulf %22, %24 : vector<256x128xf32>
    %cst_15 = arith.constant dense<0.000000e+00> : vector<256xf32>
    %26 = vector.multi_reduction <add>, %25, %cst_15 [1] : vector<256x128xf32> to vector<256xf32>
    %27 = vector.shape_cast %26 : vector<256xf32> to vector<256x1xf32>
    %cst_16 = arith.constant 1.280000e+02 : f32
    %28 = vector.broadcast %cst_16 : f32 to vector<256x1xf32>
    %29 = arith.divf %27, %28 : vector<256x1xf32>
    %30 = vector.broadcast %20 : vector<256x1xf32> to vector<256x128xf32>
    %31 = arith.subf %16, %30 : vector<256x128xf32>
    %cst_17 = arith.constant 9.99999974E-6 : f32
    %32 = vector.broadcast %cst_17 : f32 to vector<256x1xf32>
    %33 = arith.addf %29, %32 : vector<256x1xf32>
    %34 = math.rsqrt %33 : vector<256x1xf32>
    %35 = vector.broadcast %34 : vector<256x1xf32> to vector<256x128xf32>
    %36 = arith.mulf %31, %35 : vector<256x128xf32>
    %c0_18 = arith.constant 0 : index
    %c0_19 = arith.constant 0 : index
    %37 = vector.load %arg6[%c0_18, %c0_19] : memref<1x128xf32, #tpu.memory_space<vmem>>, vector<1x128xf32>
    %38 = vector.broadcast %37 : vector<1x128xf32> to vector<256x128xf32>
    %39 = arith.mulf %36, %38 : vector<256x128xf32>
    %c0_20 = arith.constant 0 : index
    %c0_21 = arith.constant 0 : index
    %40 = vector.load %arg7[%c0_20, %c0_21] : memref<1x128xf32, #tpu.memory_space<vmem>>, vector<1x128xf32>
    %41 = vector.broadcast %40 : vector<1x128xf32> to vector<256x128xf32>
    %42 = arith.addf %39, %41 : vector<256x128xf32>
    %c0_22 = arith.constant 0 : index
    %c0_23 = arith.constant 0 : index
    %43 = vector.load %arg8[%c0_22, %c0_23] : memref<256x128xf32, #tpu.memory_space<vmem>>, vector<256x128xf32>
    tpu.vector_store %arg8[%c0_22, %c0_23], %42 {strides = array<i32>} : memref<256x128xf32, #tpu.memory_space<vmem>>, vector<256x128xf32>,
    return
  }
  func.func @transform_0(%arg0: i32) -> (i32, i32) {
    %c0_i32 = arith.constant 0 : i32
    %c0_i32_0 = arith.constant 0 : i32
    return %arg0, %c0_i32 : i32, i32
  }
  func.func @transform_1(%arg0: i32) -> (i32, i32) {
    %c0_i32 = arith.constant 0 : i32
    %c0_i32_0 = arith.constant 0 : i32
    %c0_i32_1 = arith.constant 0 : i32
    return %c0_i32, %c0_i32_0 : i32, i32
  }
  func.func @transform_2(%arg0: i32) -> (i32, i32) {
    %c0_i32 = arith.constant 0 : i32
    %c0_i32_0 = arith.constant 0 : i32
    %c0_i32_1 = arith.constant 0 : i32
    return %c0_i32, %c0_i32_0 : i32, i32
  }
  func.func @transform_3(%arg0: i32) -> (i32, i32) {
    %c0_i32 = arith.constant 0 : i32
    %c0_i32_0 = arith.constant 0 : i32
    %c0_i32_1 = arith.constant 0 : i32
    return %c0_i32, %c0_i32_0 : i32, i32
  }
  func.func @transform_4(%arg0: i32) -> (i32, i32) {
    %c0_i32 = arith.constant 0 : i32
    %c0_i32_0 = arith.constant 0 : i32
    %c0_i32_1 = arith.constant 0 : i32
    return %c0_i32, %c0_i32_0 : i32, i32
  }
  func.func @transform_5(%arg0: i32) -> (i32, i32) {
    %c0_i32 = arith.constant 0 : i32
    %c0_i32_0 = arith.constant 0 : i32
    %c0_i32_1 = arith.constant 0 : i32
    return %c0_i32, %c0_i32_0 : i32, i32
  }
  func.func @transform_6(%arg0: i32) -> (i32, i32) {
    %c0_i32 = arith.constant 0 : i32
    %c0_i32_0 = arith.constant 0 : i32
    %c0_i32_1 = arith.constant 0 : i32
    return %c0_i32, %c0_i32_0 : i32, i32
  }
  func.func @transform_7(%arg0: i32) -> (i32, i32) {
    %c0_i32 = arith.constant 0 : i32
    %c0_i32_0 = arith.constant 0 : i32
    return %arg0, %c0_i32 : i32, i32
  }
}

</mosaic_0001>

<llo_original>
// kernel: tpu_custom_call.1
$region0: #{tpu_custom_call.1}
  #allocation0 [shape = 'u32[]', space=smem, size = 0x4, offset = 0x4, fixed_abs, tag = 'smem constant byte address 0x4 - core index']
  #allocation1 [shape = 'u32[144,128]{1,0:T(1,128)}', space=vmem, size = 0x12000, scoped, tag = 'internal scratch']
  %s0 = inlined_call_operand.hbm [shape: f32[512,128], index: 0, kind: input, shape index: {}]
  %s1 = inlined_call_operand.hbm [shape: bf16[128,256], index: 1, kind: input, shape index: {}]
  %s2 = inlined_call_operand.vmem [shape: f32[1,256], index: 2, kind: input, shape index: {}]
  %s3 = inlined_call_operand.hbm [shape: bf16[256,128], index: 3, kind: input, shape index: {}]
  %s4 = inlined_call_operand.vmem [shape: f32[1,128], index: 4, kind: input, shape index: {}]
  %s5 = inlined_call_operand.vmem [shape: f32[1,128], index: 5, kind: input, shape index: {}]
  %s6 = inlined_call_operand.vmem [shape: f32[1,128], index: 6, kind: input, shape index: {}]
  %s7 = inlined_call_operand.hbm [shape: f32[512,128], index: 7, kind: output, shape index: {}]
  %s8 = sld [smem:[#allocation0]]
  $region73: #{tpu_custom_call.1} parent=0
    _
  %s10 = ssub.s32 1, %s8
  %s11 = scalar_select 0, %s10, %s8
  $region1: #{tpu_custom_call.1} parent=0
    #allocation2 [shape = 'u8[262144]{0}', space=vmem, size = 0x40000, scoped, tag = 'input window, operand 0']
    #allocation3 [shape = 's32[2]{0}', space=sflag, size = 0x8, scoped, tag = 'scoped memory for tpu_custom_call.1']
    #allocation4 [shape = 's32[2]{0}', space=sflag, size = 0x8, scoped, tag = 'scoped memory for tpu_custom_call.1']
    #allocation5 [shape = 'u8[65536]{0}', space=vmem, size = 0x10000, scoped, tag = 'input window, operand 1, single buffered']
    #allocation6 [shape = 's32[1]{0}', space=sflag, size = 0x4, scoped, tag = 'scoped memory for tpu_custom_call.1']
    #allocation7 [shape = 'u8[65536]{0}', space=vmem, size = 0x10000, scoped, tag = 'input window, operand 3, single buffered']
    #allocation8 [shape = 'u8[262144]{0}', space=vmem, size = 0x40000, scoped, tag = 'output window, operand 0']
    %12 = vsyncpa [#allocation3], 0
    %s13 = scalar_lea.sflag [#allocation3], 1
    %14 = vsyncpa %s13, 0
    %15 = vsyncpa [#allocation6], 0
    %16 = vsyncpa [#allocation4], 0
    %s17 = scalar_lea.sflag [#allocation4], 1
    %18 = vsyncpa %s17, 0
    loop: start=0, step=1, limit=4
    $region2: #{tpu_custom_call.1} parent=1 // loop_pre_header
      _
    $region3: #{tpu_custom_call.1} parent=1 // loop_header
      %s20 = sphi 0, %s24
      %p21 = scmp.ge.s32.totalorder %s20, 4
      %s30 = sphi 0, %s32
      %s33 = sphi 0, %s30
      %s34 = sphi 0, %s33
      %s50 = sphi 0, %s34
      %s54 = sphi 0, %s54
      %s56 = sphi 0, %s54
      %s57 = sphi 0, %s56
      %s71 = sphi 0, %s57
      %s75 = sphi 0, %s75
      %s77 = sphi 0, %s75
      %s78 = sphi 0, %s77
      %s92 = sphi 0, %s78
      %s96 = sphi 0, %s96
      %s98 = sphi 0, %s96
      %s99 = sphi 0, %s98
      %s113 = sphi 0, %s99
      %s117 = sphi 0, %s117
      %s119 = sphi 0, %s117
      %s120 = sphi 0, %s119
      %s134 = sphi 0, %s120
      %s138 = sphi 0, %s138
      %s140 = sphi 0, %s138
      %s141 = sphi 0, %s140
      %s155 = sphi 0, %s141
      %s159 = sphi 0, %s159
      %s161 = sphi 0, %s159
      %s162 = sphi 0, %s161
      %s176 = sphi 0, %s162
      %s182 = sphi 0, %s184
      %s185 = sphi 0, %s182
      %s186 = sphi 0, %s185
      %s202 = sphi 0, %s186
    $region4: #{tpu_custom_call.1} parent=1 // loop_header_branch
      %23 = sbr.rel (%p21) target = $region8
    $region5: #{tpu_custom_call.1} parent=1 // loop_body
      %s25 = ssub.s32 %s20, 1
      %s26 = ssub.s32 %s20, 2
      %s27 = sadd.s32 %s20, 1
      %s28 = ssub.s32 %s20, %s27
      %p29 = scmp.eq.s32.totalorder %s28, 0
      %s31 = sadd.s32 %s30, 1
      %s32 = scalar_select %p29, %s30, %s31
      %p35 = pneg %p29
      %p36 = scmp.eq.s32.totalorder %s20, 1
      %p37 = por %p35, %p36
      %p38 = scmp.ne.s32.totalorder %s30, %s33
      %p39 = scmp.eq.s32.totalorder %s20, 0
      %p40 = por %p38, %p39
      %p41 = scmp.ne.s32.totalorder %s30, %s33
      %p42 = scmp.eq.s32.totalorder %s25, 1
      %p43 = por %p41, %p42
      %p44 = scmp.ne.s32.totalorder %s33, %s34
      %p45 = scmp.eq.s32.totalorder %s25, 0
      %p46 = por %p44, %p45
      %p47 = scmp.ne.s32.totalorder %s33, %s34
      %p48 = scmp.eq.s32.totalorder %s26, 1
      %p49 = por %p47, %p48
      %p51 = scmp.ne.s32.totalorder %s34, %s50
      %p52 = scmp.eq.s32.totalorder %s26, 0
      %p53 = por %p51, %p52
      %s55 = sadd.s32 %s54, 1
      %p58 = scmp.eq.s32.totalorder %s20, 1
      %p59 = scmp.ne.s32.totalorder %s54, %s56
      %p60 = scmp.eq.s32.totalorder %s20, 0
      %p61 = por %p59, %p60
      %p62 = scmp.ne.s32.totalorder %s54, %s56
      %p63 = scmp.eq.s32.totalorder %s25, 1
      %p64 = por %p62, %p63
      %p65 = scmp.ne.s32.totalorder %s56, %s57
      %p66 = scmp.eq.s32.totalorder %s25, 0
      %p67 = por %p65, %p66
      %p68 = scmp.ne.s32.totalorder %s56, %s57
      %p69 = scmp.eq.s32.totalorder %s26, 1
      %p70 = por %p68, %p69
      %p72 = scmp.ne.s32.totalorder %s57, %s71
      %p73 = scmp.eq.s32.totalorder %s26, 0
      %p74 = por %p72, %p73
      %s76 = sadd.s32 %s75, 1
      %p79 = scmp.eq.s32.totalorder %s20, 1
      %p80 = scmp.ne.s32.totalorder %s75, %s77
      %p81 = scmp.eq.s32.totalorder %s20, 0
      %p82 = por %p80, %p81
      %p83 = scmp.ne.s32.totalorder %s75, %s77
      %p84 = scmp.eq.s32.totalorder %s25, 1
      %p85 = por %p83, %p84
      %p86 = scmp.ne.s32.totalorder %s77, %s78
      %p87 = scmp.eq.s32.totalorder %s25, 0
      %p88 = por %p86, %p87
      %p89 = scmp.ne.s32.totalorder %s77, %s78
      %p90 = scmp.eq.s32.totalorder %s26, 1
      %p91 = por %p89, %p90
      %p93 = scmp.ne.s32.totalorder %s78, %s92
      %p94 = scmp.eq.s32.totalorder %s26, 0
      %p95 = por %p93, %p94
      %s97 = sadd.s32 %s96, 1
      %p100 = scmp.eq.s32.totalorder %s20, 1
      %p101 = scmp.ne.s32.totalorder %s96, %s98
      %p102 = scmp.eq.s32.totalorder %s20, 0
      %p103 = por %p101, %p102
      %p104 = scmp.ne.s32.totalorder %s96, %s98
      %p105 = scmp.eq.s32.totalorder %s25, 1
      %p106 = por %p104, %p105
      %p107 = scmp.ne.s32.totalorder %s98, %s99
      %p108 = scmp.eq.s32.totalorder %s25, 0
      %p109 = por %p107, %p108
      %p110 = scmp.ne.s32.totalorder %s98, %s99
      %p111 = scmp.eq.s32.totalorder %s26, 1
      %p112 = por %p110, %p111
      %p114 = scmp.ne.s32.totalorder %s99, %s113
      %p115 = scmp.eq.s32.totalorder %s26, 0
      %p116 = por %p114, %p115
      %s118 = sadd.s32 %s117, 1
      %p121 = scmp.eq.s32.totalorder %s20, 1
      %p122 = scmp.ne.s32.totalorder %s117, %s119
      %p123 = scmp.eq.s32.totalorder %s20, 0
      %p124 = por %p122, %p123
      %p125 = scmp.ne.s32.totalorder %s117, %s119
      %p126 = scmp.eq.s32.totalorder %s25, 1
      %p127 = por %p125, %p126
      %p128 = scmp.ne.s32.totalorder %s119, %s120
      %p129 = scmp.eq.s32.totalorder %s25, 0
      %p130 = por %p128, %p129
      %p131 = scmp.ne.s32.totalorder %s119, %s120
      %p132 = scmp.eq.s32.totalorder %s26, 1
      %p133 = por %p131, %p132
      %p135 = scmp.ne.s32.totalorder %s120, %s134
      %p136 = scmp.eq.s32.totalorder %s26, 0
      %p137 = por %p135, %p136
      %s139 = sadd.s32 %s138, 1
      %p142 = scmp.eq.s32.totalorder %s20, 1
      %p143 = scmp.ne.s32.totalorder %s138, %s140
      %p144 = scmp.eq.s32.totalorder %s20, 0
      %p145 = por %p143, %p144
      %p146 = scmp.ne.s32.totalorder %s138, %s140
      %p147 = scmp.eq.s32.totalorder %s25, 1
      %p148 = por %p146, %p147
      %p149 = scmp.ne.s32.totalorder %s140, %s141
      %p150 = scmp.eq.s32.totalorder %s25, 0
      %p151 = por %p149, %p150
      %p152 = scmp.ne.s32.totalorder %s140, %s141
      %p153 = scmp.eq.s32.totalorder %s26, 1
      %p154 = por %p152, %p153
      %p156 = scmp.ne.s32.totalorder %s141, %s155
      %p157 = scmp.eq.s32.totalorder %s26, 0
      %p158 = por %p156, %p157
      %s160 = sadd.s32 %s159, 1
      %p163 = scmp.eq.s32.totalorder %s20, 1
      %p164 = scmp.ne.s32.totalorder %s159, %s161
      %p165 = scmp.eq.s32.totalorder %s20, 0
      %p166 = por %p164, %p165
      %p167 = scmp.ne.s32.totalorder %s159, %s161
      %p168 = scmp.eq.s32.totalorder %s25, 1
      %p169 = por %p167, %p168
      %p170 = scmp.ne.s32.totalorder %s161, %s162
      %p171 = scmp.eq.s32.totalorder %s25, 0
      %p172 = por %p170, %p171
      %p173 = scmp.ne.s32.totalorder %s161, %s162
      %p174 = scmp.eq.s32.totalorder %s26, 1
      %p175 = por %p173, %p174
      %p177 = scmp.ne.s32.totalorder %s162, %s176
      %p178 = scmp.eq.s32.totalorder %s26, 0
      %p179 = por %p177, %p178
      %s180 = ssub.s32 %s20, %s27
      %p181 = scmp.eq.s32.totalorder %s180, 0
      %s183 = sadd.s32 %s182, 1
      %s184 = scalar_select %p181, %s182, %s183
      %p187 = pneg %p181
      %p188 = scmp.eq.s32.totalorder %s20, 1
      %p189 = por %p187, %p188
      %p190 = scmp.ne.s32.totalorder %s182, %s185
      %p191 = scmp.eq.s32.totalorder %s20, 0
      %p192 = por %p190, %p191
      %p193 = scmp.ne.s32.totalorder %s182, %s185
      %p194 = scmp.eq.s32.totalorder %s25, 1
      %p195 = por %p193, %p194
      %p196 = scmp.ne.s32.totalorder %s185, %s186
      %p197 = scmp.eq.s32.totalorder %s25, 0
      %p198 = por %p196, %p197
      %p199 = scmp.ne.s32.totalorder %s185, %s186
      %p200 = scmp.eq.s32.totalorder %s26, 1
      %p201 = por %p199, %p200
      %p203 = scmp.ne.s32.totalorder %s186, %s202
      %p204 = scmp.eq.s32.totalorder %s26, 0
      %p205 = por %p203, %p204
      %p206 = scmp.le.s32.totalorder 1, %s20
      %p207 = scmp.lt.s32.totalorder %s20, 3
      %p208 = pnand %p206, %p207
      %p209 = pneg %p208
      // Predicated region
      $region9: #{tpu_custom_call.1} parent=5 // pred_check
        _
      $region10: #{tpu_custom_call.1} parent=5 // pred_check_branch
        %211 = sbr.rel (%p208) target = $region12
      $region11: #{tpu_custom_call.1} parent=5 // pred_region
        %s212 = ssub.s32 %s20, 1
        // Predicated region
        $region13: #{tpu_custom_call.1} parent=11 // pred_check
          %p213 = pneg %p67
        $region14: #{tpu_custom_call.1} parent=11 // pred_check_branch
          %215 = sbr.rel (%p213) target = $region16
        $region15: #{tpu_custom_call.1} parent=11 // pred_region
          %s217 = ssub.s32 2048, 2048
          %218 = vsyncadd [#allocation6], %s217
          %s219 = sshll.u32 [#allocation5], 4
          %s220 = int_to_ptr.vmem [resolvable:$true] %s219
          %225 = dma.hbm_to_vmem [thread:$0]  %s1, 2048, %s220, [#allocation6], 128, 128, 8
        $region16: #{tpu_custom_call.1} parent=11 // pred_fallthru
          _
        // Predicated region
        $region17: #{tpu_custom_call.1} parent=11 // pred_check
          %p226 = pneg %p88
        $region18: #{tpu_custom_call.1} parent=11 // pred_check_branch
          %228 = sbr.rel (%p226) target = $region20
        $region19: #{tpu_custom_call.1} parent=11 // pred_region
          _
        $region20: #{tpu_custom_call.1} parent=11 // pred_fallthru
          _
        // Predicated region
        $region21: #{tpu_custom_call.1} parent=11 // pred_check
          %p229 = pneg %p109
        $region22: #{tpu_custom_call.1} parent=11 // pred_check_branch
          %231 = sbr.rel (%p229) target = $region24
        $region23: #{tpu_custom_call.1} parent=11 // pred_region
          %s233 = ssub.s32 2048, 2048
          %234 = vsyncadd [#allocation6], %s233
          %s235 = sshll.u32 [#allocation7], 4
          %s236 = int_to_ptr.vmem [resolvable:$true] %s235
          %241 = dma.hbm_to_vmem [thread:$0]  %s3, 2048, %s236, [#allocation6], 64, 64, 4
        $region24: #{tpu_custom_call.1} parent=11 // pred_fallthru
          _
        // Predicated region
        $region25: #{tpu_custom_call.1} parent=11 // pred_check
          %p242 = pneg %p130
        $region26: #{tpu_custom_call.1} parent=11 // pred_check_branch
          %244 = sbr.rel (%p242) target = $region28
        $region27: #{tpu_custom_call.1} parent=11 // pred_region
          _
        $region28: #{tpu_custom_call.1} parent=11 // pred_fallthru
          _
        // Predicated region
        $region29: #{tpu_custom_call.1} parent=11 // pred_check
          %p245 = pneg %p151
        $region30: #{tpu_custom_call.1} parent=11 // pred_check_branch
          %247 = sbr.rel (%p245) target = $region32
        $region31: #{tpu_custom_call.1} parent=11 // pred_region
          _
        $region32: #{tpu_custom_call.1} parent=11 // pred_fallthru
          _
        // Predicated region
        $region33: #{tpu_custom_call.1} parent=11 // pred_check
          %p248 = pneg %p172
        $region34: #{tpu_custom_call.1} parent=11 // pred_check_branch
          %250 = sbr.rel (%p248) target = $region36
        $region35: #{tpu_custom_call.1} parent=11 // pred_region
          _
        $region36: #{tpu_custom_call.1} parent=11 // pred_fallthru
          _
      $region12: #{tpu_custom_call.1} parent=5 // pred_fallthru
        _
      %p251 = scmp.lt.s32.totalorder %s20, 2
      // Predicated region
      $region37: #{tpu_custom_call.1} parent=5 // pred_check
        %p252 = pneg %p251
      $region38: #{tpu_custom_call.1} parent=5 // pred_check_branch
        %254 = sbr.rel (%p252) target = $region40
      $region39: #{tpu_custom_call.1} parent=5 // pred_region
        // Predicated region
        $region41: #{tpu_custom_call.1} parent=39 // pred_check
          %p255 = pneg %p40
        $region42: #{tpu_custom_call.1} parent=39 // pred_check_branch
          %257 = sbr.rel (%p255) target = $region44
        $region43: #{tpu_custom_call.1} parent=39 // pred_region
          %s258 = sand.u32 %s30, 1
          %s259 = scalar_lea.sflag [#allocation3], %s258
          %s260 = sand.u32 %s30, 1
          %s261 = smul.addr %s260, 256
          %s262 = scalar_lea.vmem [#allocation2], %s261
          %s263 = smul.u32 32, %s20
          %s265 = ssub.s32 4096, 4096
          %266 = vsyncadd %s259, %s265
          %s267 = smul.addr %s263, 128
          %s268 = scalar_lea.hbm %s0, %s267
          %s269 = sshll.u32 %s262, 4
          %s270 = int_to_ptr.vmem [resolvable:$true] %s269
          %275 = dma.hbm_to_vmem [thread:$0]  %s268, 4096, %s270, %s259, 128, 128, 8
        $region44: #{tpu_custom_call.1} parent=39 // pred_fallthru
          _
      $region40: #{tpu_custom_call.1} parent=5 // pred_fallthru
        _
      %p276 = scmp.le.s32.totalorder 1, %s20
      %p277 = scmp.lt.s32.totalorder %s20, 3
      %p278 = pnand %p276, %p277
      %p279 = pneg %p278
      // Predicated region
      $region45: #{tpu_custom_call.1} parent=5 // pred_check
        _
      $region46: #{tpu_custom_call.1} parent=5 // pred_check_branch
        %281 = sbr.rel (%p278) target = $region48
      $region47: #{tpu_custom_call.1} parent=5 // pred_region
        %s282 = ssub.s32 %s20, 1
        %s283 = sand.u32 %s33, 1
        %s284 = scalar_lea.sflag [#allocation3], %s283
        %s285 = sand.u32 %s33, 1
        %s286 = smul.addr %s285, 256
        %s287 = scalar_lea.vmem [#allocation2], %s286
        // Predicated region
        $region49: #{tpu_custom_call.1} parent=47 // pred_check
          %p288 = pneg %p46
        $region50: #{tpu_custom_call.1} parent=47 // pred_check_branch
          %290 = sbr.rel (%p288) target = $region52
        $region51: #{tpu_custom_call.1} parent=47 // pred_region
          %291 = dma.done %s284, 4096
        $region52: #{tpu_custom_call.1} parent=47 // pred_fallthru
          _
        // Predicated region
        $region53: #{tpu_custom_call.1} parent=47 // pred_check
          %p292 = pneg %p67
        $region54: #{tpu_custom_call.1} parent=47 // pred_check_branch
          %294 = sbr.rel (%p292) target = $region56
        $region55: #{tpu_custom_call.1} parent=47 // pred_region
          %295 = dma.done [#allocation6], 2048
        $region56: #{tpu_custom_call.1} parent=47 // pred_fallthru
          _
        // Predicated region
        $region57: #{tpu_custom_call.1} parent=47 // pred_check
          %p296 = pneg %p109
        $region58: #{tpu_custom_call.1} parent=47 // pred_check_branch
          %298 = sbr.rel (%p296) target = $region60
        $region59: #{tpu_custom_call.1} parent=47 // pred_region
          %299 = dma.done [#allocation6], 2048
        $region60: #{tpu_custom_call.1} parent=47 // pred_fallthru
          _
        %s300 = sand.u32 %s33, 1
        %s301 = scalar_lea.sflag [#allocation3], %s300
        %s302 = sand.u32 %s33, 1
        %s303 = smul.addr %s302, 256
        %s304 = scalar_lea.vmem [#allocation2], %s303
        %p305 = pneg %p46
        %p306 = pneg %p43
        %p307 = pneg %p67
        %p308 = pneg %p64
        %p309 = pneg %p88
        %p310 = pneg %p85
        %p311 = pneg %p109
        %p312 = pneg %p106
        %p313 = pneg %p130
        %p314 = pneg %p127
        %p315 = pneg %p151
        %p316 = pneg %p148
        %p317 = pneg %p172
        %p318 = pneg %p169
        %p319 = pneg %p198
        %p320 = pneg %p195
        %s321 = sand.u32 %s185, 1
        %s322 = scalar_lea.sflag [#allocation4], %s321
        %s323 = sand.u32 %s185, 1
        %s324 = smul.addr %s323, 256
        %s325 = scalar_lea.vmem [#allocation8], %s324
        %s326 = smul.u32 32, %s25
        %s327 = smul.u32 32, %s25
        %v329 = vld [vmem:[%s287] sm:$0xff]
        %v330 = vld [vmem:[%s287 + $0x8] sm:$0xff]
        %v331 = vld [vmem:[%s287 + $0x10] sm:$0xff]
        %v332 = vld [vmem:[%s287 + $0x18] sm:$0xff]
        %v333 = vld [vmem:[%s287 + $0x20] sm:$0xff]
        %v334 = vld [vmem:[%s287 + $0x28] sm:$0xff]
        %v335 = vld [vmem:[%s287 + $0x30] sm:$0xff]
        %v336 = vld [vmem:[%s287 + $0x38] sm:$0xff]
        %v337 = vld [vmem:[%s287 + $0x40] sm:$0xff]
        %v338 = vld [vmem:[%s287 + $0x48] sm:$0xff]
        %v339 = vld [vmem:[%s287 + $0x50] sm:$0xff]
        %v340 = vld [vmem:[%s287 + $0x58] sm:$0xff]
        %v341 = vld [vmem:[%s287 + $0x60] sm:$0xff]
        %v342 = vld [vmem:[%s287 + $0x68] sm:$0xff]
        %v343 = vld [vmem:[%s287 + $0x70] sm:$0xff]
        %v344 = vld [vmem:[%s287 + $0x78] sm:$0xff]
        %v345 = vld [vmem:[%s287 + $0x80] sm:$0xff]
        %v346 = vld [vmem:[%s287 + $0x88] sm:$0xff]
        %v347 = vld [vmem:[%s287 + $0x90] sm:$0xff]
        %v348 = vld [vmem:[%s287 + $0x98] sm:$0xff]
        %v349 = vld [vmem:[%s287 + $0xa0] sm:$0xff]
        %v350 = vld [vmem:[%s287 + $0xa8] sm:$0xff]
        %v351 = vld [vmem:[%s287 + $0xb0] sm:$0xff]
        %v352 = vld [vmem:[%s287 + $0xb8] sm:$0xff]
        %v353 = vld [vmem:[%s287 + $0xc0] sm:$0xff]
        %v354 = vld [vmem:[%s287 + $0xc8] sm:$0xff]
        %v355 = vld [vmem:[%s287 + $0xd0] sm:$0xff]
        %v356 = vld [vmem:[%s287 + $0xd8] sm:$0xff]
        %v357 = vld [vmem:[%s287 + $0xe0] sm:$0xff]
        %v358 = vld [vmem:[%s287 + $0xe8] sm:$0xff]
        %v359 = vld [vmem:[%s287 + $0xf0] sm:$0xff]
        %v360 = vld [vmem:[%s287 + $0xf8] sm:$0xff]
        %v361 = vpack.c.bf16 %v330, %v329
        %v362 = vpack.c.bf16 %v332, %v331
        %v363 = vpack.c.bf16 %v334, %v333
        %v364 = vpack.c.bf16 %v336, %v335
        %v365 = vpack.c.bf16 %v338, %v337
        %v366 = vpack.c.bf16 %v340, %v339
        %v367 = vpack.c.bf16 %v342, %v341
        %v368 = vpack.c.bf16 %v344, %v343
        %v369 = vpack.c.bf16 %v346, %v345
        %v370 = vpack.c.bf16 %v348, %v347
        %v371 = vpack.c.bf16 %v350, %v349
        %v372 = vpack.c.bf16 %v352, %v351
        %v373 = vpack.c.bf16 %v354, %v353
        %v374 = vpack.c.bf16 %v356, %v355
        %v375 = vpack.c.bf16 %v358, %v357
        %v376 = vpack.c.bf16 %v360, %v359
        %v377 = vld [vmem:[#allocation5] sm:$0xff]
        %v378 = vld [vmem:[#allocation5 + $0x8] sm:$0xff]
        %v379 = vld [vmem:[#allocation5 + $0x10] sm:$0xff]
        %v380 = vld [vmem:[#allocation5 + $0x18] sm:$0xff]
        %v381 = vld [vmem:[#allocation5 + $0x20] sm:$0xff]
        %v382 = vld [vmem:[#allocation5 + $0x28] sm:$0xff]
        %v383 = vld [vmem:[#allocation5 + $0x30] sm:$0xff]
        %v384 = vld [vmem:[#allocation5 + $0x38] sm:$0xff]
        %v385 = vld [vmem:[#allocation5 + $0x40] sm:$0xff]
        %v386 = vld [vmem:[#allocation5 + $0x48] sm:$0xff]
        %v387 = vld [vmem:[#allocation5 + $0x50] sm:$0xff]
        %v388 = vld [vmem:[#allocation5 + $0x58] sm:$0xff]
        %v389 = vld [vmem:[#allocation5 + $0x60] sm:$0xff]
        %v390 = vld [vmem:[#allocation5 + $0x68] sm:$0xff]
        %v391 = vld [vmem:[#allocation5 + $0x70] sm:$0xff]
        %v392 = vld [vmem:[#allocation5 + $0x78] sm:$0xff]
        %v393 = vld [vmem:[%s2] sm:$0x3]
        %v395 = vlaneseq
        %v396 = vshrl.u32 %v395, 7
        %v397 = vsub.s32 0, %v396
        %v398 = vrot.slane %v393, %v397
        %v399 = vlaneseq
        %v400 = vshrl.u32 %v399, 7
        %v401 = vsub.s32 1, %v400
        %v402 = vrot.slane %v393, %v401
        %v421 = vunpack.c.l.b16 %v377
        %v422 = vunpack.c.h.b16 %v377
        %v423 = vunpack.c.l.b16 %v378
        %v424 = vunpack.c.h.b16 %v378
        %v425 = vunpack.c.l.b16 %v379
        %v426 = vunpack.c.h.b16 %v379
        %v427 = vunpack.c.l.b16 %v380
        %v428 = vunpack.c.h.b16 %v380
        %v429 = vunpack.c.l.b16 %v381
        %v430 = vunpack.c.h.b16 %v381
        %v431 = vunpack.c.l.b16 %v382
        %v432 = vunpack.c.h.b16 %v382
        %v433 = vunpack.c.l.b16 %v383
        %v434 = vunpack.c.h.b16 %v383
        %v435 = vunpack.c.l.b16 %v384
        %v436 = vunpack.c.h.b16 %v384
        %v437 = vunpack.c.l.b16 %v385
        %v438 = vunpack.c.h.b16 %v385
        %v439 = vunpack.c.l.b16 %v386
        %v440 = vunpack.c.h.b16 %v386
        %v441 = vunpack.c.l.b16 %v387
        %v442 = vunpack.c.h.b16 %v387
        %v443 = vunpack.c.l.b16 %v388
        %v444 = vunpack.c.h.b16 %v388
        %v445 = vunpack.c.l.b16 %v389
        %v446 = vunpack.c.h.b16 %v389
        %v447 = vunpack.c.l.b16 %v390
        %v448 = vunpack.c.h.b16 %v390
        %v449 = vunpack.c.l.b16 %v391
        %v450 = vunpack.c.h.b16 %v391
        %v451 = vunpack.c.l.b16 %v392
        %v452 = vunpack.c.h.b16 %v392
        %v453 = vpack.c.b16 %v423, %v421
        %v454 = vpack.c.b16 %v424, %v422
        %v455 = vpack.c.b16 %v427, %v425
        %v456 = vpack.c.b16 %v428, %v426
        %v457 = vpack.c.b16 %v431, %v429
        %v458 = vpack.c.b16 %v432, %v430
        %v459 = vpack.c.b16 %v435, %v433
        %v460 = vpack.c.b16 %v436, %v434
        %v461 = vpack.c.b16 %v439, %v437
        %v462 = vpack.c.b16 %v440, %v438
        %v463 = vpack.c.b16 %v443, %v441
        %v464 = vpack.c.b16 %v444, %v442
        %v465 = vpack.c.b16 %v447, %v445
        %v466 = vpack.c.b16 %v448, %v446
        %v467 = vpack.c.b16 %v451, %v449
        %v468 = vpack.c.b16 %v452, %v450
        %485 = vmatprep.subr.bf16.mxu0 %v454
        %486 = vmatpush1.bf16.msra.mxu0 %v453
        %487 = vmatprep.subr.bf16.mxu0 %v456
        %488 = vmatpush1.bf16.msra.mxu0 %v455
        %489 = vmatprep.subr.bf16.mxu0 %v458
        %490 = vmatpush1.bf16.msra.mxu0 %v457
        %491 = vmatprep.subr.bf16.mxu0 %v460
        %492 = vmatpush1.bf16.msra.mxu0 %v459
        %493 = vmatprep.subr.bf16.mxu0 %v462
        %494 = vmatpush1.bf16.msra.mxu0 %v461
        %495 = vmatprep.subr.bf16.mxu0 %v464
        %496 = vmatpush1.bf16.msra.mxu0 %v463
        %497 = vmatprep.subr.bf16.mxu0 %v466
        %498 = vmatpush1.bf16.msra.mxu0 %v465
        %499 = vmatprep.subr.bf16.mxu0 %v468
        %500 = vmatpush1.bf16.msra.mxu0 %v467
        %501 = vmatprep.subr.bf16.mxu0 0
        %502 = vmatpush1.bf16.msra.mxu0 0
        %503 = vmatprep.subr.bf16.mxu0 0
        %504 = vmatpush1.bf16.msra.mxu0 0
        %505 = vmatprep.subr.bf16.mxu0 0
        %506 = vmatpush1.bf16.msra.mxu0 0
        %507 = vmatprep.subr.bf16.mxu0 0
        %508 = vmatpush1.bf16.msra.mxu0 0
        %509 = vmatprep.subr.bf16.mxu0 0
        %510 = vmatpush1.bf16.msra.mxu0 0
        %511 = vmatprep.subr.bf16.mxu0 0
        %512 = vmatpush1.bf16.msra.mxu0 0
        %513 = vmatprep.subr.bf16.mxu0 0
        %514 = vmatpush1.bf16.msra.mxu0 0
        %515 = vmatprep.subr.bf16.mxu0 0
        %516 = vmatpush1.bf16.msra.mxu0 0
        %517 = vmatprep.mubr.bf16.mxu0 0
        %518 = vmatmul.mubr.bf16.gmra.mrb[0].mxu0 %v361
        %v519 = vpop.f32.mrb[0].mxu0
        %v520 = vadd.f32 %v398, %v519
        %v521 = vpop.f32.mrb[0].mxu0
        %v522 = vadd.f32 %v402, %v521
        %v523 = vpop.f32.mrb[0].mxu0
        %v524 = vadd.f32 %v398, %v523
        %v525 = vpop.f32.mrb[0].mxu0
        %v526 = vadd.f32 %v402, %v525
        %527 = vmatprep.mubr.bf16.mxu0 0
        %528 = vmatmul.mubr.bf16.gmra.mrb[0].mxu0 %v362
        %v529 = vpop.f32.mrb[0].mxu0
        %v530 = vadd.f32 %v398, %v529
        %v531 = vpop.f32.mrb[0].mxu0
        %v532 = vadd.f32 %v402, %v531
        %v533 = vpop.f32.mrb[0].mxu0
        %v534 = vadd.f32 %v398, %v533
        %v535 = vpop.f32.mrb[0].mxu0
        %v536 = vadd.f32 %v402, %v535
        %537 = vmatprep.mubr.bf16.mxu0 0
        %538 = vmatmul.mubr.bf16.gmra.mrb[0].mxu0 %v363
        %v539 = vpop.f32.mrb[0].mxu0
        %v540 = vadd.f32 %v398, %v539
        %v541 = vpop.f32.mrb[0].mxu0
        %v542 = vadd.f32 %v402, %v541
        %v543 = vpop.f32.mrb[0].mxu0
        %v544 = vadd.f32 %v398, %v543
        %v545 = vpop.f32.mrb[0].mxu0
        %v546 = vadd.f32 %v402, %v545
        %547 = vmatprep.mubr.bf16.mxu0 0
        %548 = vmatmul.mubr.bf16.gmra.mrb[0].mxu0 %v364
        %v549 = vpop.f32.mrb[0].mxu0
        %v550 = vadd.f32 %v398, %v549
        %v551 = vpop.f32.mrb[0].mxu0
        %v552 = vadd.f32 %v402, %v551
        %v553 = vpop.f32.mrb[0].mxu0
        %v554 = vadd.f32 %v398, %v553
        %v555 = vpop.f32.mrb[0].mxu0
        %v556 = vadd.f32 %v402, %v555
        %557 = vmatprep.mubr.bf16.mxu0 0
        %558 = vmatmul.mubr.bf16.gmra.mrb[0].mxu0 %v365
        %v559 = vpop.f32.mrb[0].mxu0
        %v560 = vadd.f32 %v398, %v559
        %v561 = vpop.f32.mrb[0].mxu0
        %v562 = vadd.f32 %v402, %v561
        %v563 = vpop.f32.mrb[0].mxu0
        %v564 = vadd.f32 %v398, %v563
        %v565 = vpop.f32.mrb[0].mxu0
        %v566 = vadd.f32 %v402, %v565
        %567 = vmatprep.mubr.bf16.mxu0 0
        %568 = vmatmul.mubr.bf16.gmra.mrb[0].mxu0 %v366
        %v569 = vpop.f32.mrb[0].mxu0
        %v570 = vadd.f32 %v398, %v569
        %v571 = vpop.f32.mrb[0].mxu0
        %v572 = vadd.f32 %v402, %v571
        %v573 = vpop.f32.mrb[0].mxu0
        %v574 = vadd.f32 %v398, %v573
        %v575 = vpop.f32.mrb[0].mxu0
        %v576 = vadd.f32 %v402, %v575
        %577 = vmatprep.mubr.bf16.mxu0 0
        %578 = vmatmul.mubr.bf16.gmra.mrb[0].mxu0 %v367
        %v579 = vpop.f32.mrb[0].mxu0
        %v580 = vadd.f32 %v398, %v579
        %v581 = vpop.f32.mrb[0].mxu0
        %v582 = vadd.f32 %v402, %v581
        %v583 = vpop.f32.mrb[0].mxu0
        %v584 = vadd.f32 %v398, %v583
        %v585 = vpop.f32.mrb[0].mxu0
        %v586 = vadd.f32 %v402, %v585
        %587 = vmatprep.mubr.bf16.mxu0 0
        %588 = vmatmul.mubr.bf16.gmra.mrb[0].mxu0 %v368
        %v589 = vpop.f32.mrb[0].mxu0
        %v590 = vadd.f32 %v398, %v589
        %v591 = vpop.f32.mrb[0].mxu0
        %v592 = vadd.f32 %v402, %v591
        %v593 = vpop.f32.mrb[0].mxu0
        %v594 = vadd.f32 %v398, %v593
        %v595 = vpop.f32.mrb[0].mxu0
        %v596 = vadd.f32 %v402, %v595
        %597 = vmatprep.mubr.bf16.mxu0 0
        %598 = vmatmul.mubr.bf16.gmra.mrb[0].mxu0 %v369
        %v599 = vpop.f32.mrb[0].mxu0
        %v600 = vadd.f32 %v398, %v599
        %v601 = vpop.f32.mrb[0].mxu0
        %v602 = vadd.f32 %v402, %v601
        %v603 = vpop.f32.mrb[0].mxu0
        %v604 = vadd.f32 %v398, %v603
        %v605 = vpop.f32.mrb[0].mxu0
        %v606 = vadd.f32 %v402, %v605
        %607 = vmatprep.mubr.bf16.mxu0 0
        %608 = vmatmul.mubr.bf16.gmra.mrb[0].mxu0 %v370
        %v609 = vpop.f32.mrb[0].mxu0
        %v610 = vadd.f32 %v398, %v609
        %v611 = vpop.f32.mrb[0].mxu0
        %v612 = vadd.f32 %v402, %v611
        %v613 = vpop.f32.mrb[0].mxu0
        %v614 = vadd.f32 %v398, %v613
        %v615 = vpop.f32.mrb[0].mxu0
        %v616 = vadd.f32 %v402, %v615
        %617 = vmatprep.mubr.bf16.mxu0 0
        %618 = vmatmul.mubr.bf16.gmra.mrb[0].mxu0 %v371
        %v619 = vpop.f32.mrb[0].mxu0
        %v620 = vadd.f32 %v398, %v619
        %v621 = vpop.f32.mrb[0].mxu0
        %v622 = vadd.f32 %v402, %v621
        %v623 = vpop.f32.mrb[0].mxu0
        %v624 = vadd.f32 %v398, %v623
        %v625 = vpop.f32.mrb[0].mxu0
        %v626 = vadd.f32 %v402, %v625
        %627 = vmatprep.mubr.bf16.mxu0 0
        %628 = vmatmul.mubr.bf16.gmra.mrb[0].mxu0 %v372
        %v629 = vpop.f32.mrb[0].mxu0
        %v630 = vadd.f32 %v398, %v629
        %v631 = vpop.f32.mrb[0].mxu0
        %v632 = vadd.f32 %v402, %v631
        %v633 = vpop.f32.mrb[0].mxu0
        %v634 = vadd.f32 %v398, %v633
        %v635 = vpop.f32.mrb[0].mxu0
        %v636 = vadd.f32 %v402, %v635
        %637 = vmatprep.mubr.bf16.mxu0 0
        %638 = vmatmul.mubr.bf16.gmra.mrb[0].mxu0 %v373
        %v639 = vpop.f32.mrb[0].mxu0
        %v640 = vadd.f32 %v398, %v639
        %v641 = vpop.f32.mrb[0].mxu0
        %v642 = vadd.f32 %v402, %v641
        %v643 = vpop.f32.mrb[0].mxu0
        %v644 = vadd.f32 %v398, %v643
        %v645 = vpop.f32.mrb[0].mxu0
        %v646 = vadd.f32 %v402, %v645
        %647 = vmatprep.mubr.bf16.mxu0 0
        %648 = vmatmul.mubr.bf16.gmra.mrb[0].mxu0 %v374
        %v649 = vpop.f32.mrb[0].mxu0
        %v650 = vadd.f32 %v398, %v649
        %v651 = vpop.f32.mrb[0].mxu0
        %v652 = vadd.f32 %v402, %v651
        %v653 = vpop.f32.mrb[0].mxu0
        %v654 = vadd.f32 %v398, %v653
        %v655 = vpop.f32.mrb[0].mxu0
        %v656 = vadd.f32 %v402, %v655
        %657 = vmatprep.mubr.bf16.mxu0 0
        %658 = vmatmul.mubr.bf16.gmra.mrb[0].mxu0 %v375
        %v659 = vpop.f32.mrb[0].mxu0
        %v660 = vadd.f32 %v398, %v659
        %v661 = vpop.f32.mrb[0].mxu0
        %v662 = vadd.f32 %v402, %v661
        %v663 = vpop.f32.mrb[0].mxu0
        %v664 = vadd.f32 %v398, %v663
        %v665 = vpop.f32.mrb[0].mxu0
        %v666 = vadd.f32 %v402, %v665
        %667 = vmatprep.mubr.bf16.mxu0 0
        %668 = vmatmul.mubr.bf16.gmra.mrb[0].mxu0 %v376
        %v669 = vpop.f32.mrb[0].mxu0
        %v670 = vadd.f32 %v398, %v669
        %v671 = vpop.f32.mrb[0].mxu0
        %v672 = vadd.f32 %v402, %v671
        %v673 = vpop.f32.mrb[0].mxu0
        %v674 = vadd.f32 %v398, %v673
        %v675 = vpop.f32.mrb[0].mxu0
        %v676 = vadd.f32 %v402, %v675
        %677 = vdwg.mxu0
        %v678 = vmax.f32 %v520, 0.0
        %v679 = vmax.f32 %v522, 0.0
        %v680 = vmax.f32 %v524, 0.0
        %v681 = vmax.f32 %v526, 0.0
        %v682 = vmax.f32 %v530, 0.0
        %v683 = vmax.f32 %v532, 0.0
        %v684 = vmax.f32 %v534, 0.0
        %v685 = vmax.f32 %v536, 0.0
        %v686 = vmax.f32 %v540, 0.0
        %v687 = vmax.f32 %v542, 0.0
        %v688 = vmax.f32 %v544, 0.0
        %v689 = vmax.f32 %v546, 0.0
        %v690 = vmax.f32 %v550, 0.0
        %v691 = vmax.f32 %v552, 0.0
        %v692 = vmax.f32 %v554, 0.0
        %v693 = vmax.f32 %v556, 0.0
        %v694 = vmax.f32 %v560, 0.0
        %v695 = vmax.f32 %v562, 0.0
        %v696 = vmax.f32 %v564, 0.0
        %v697 = vmax.f32 %v566, 0.0
        %v698 = vmax.f32 %v570, 0.0
        %v699 = vmax.f32 %v572, 0.0
        %v700 = vmax.f32 %v574, 0.0
        %v701 = vmax.f32 %v576, 0.0
        %v702 = vmax.f32 %v580, 0.0
        %v703 = vmax.f32 %v582, 0.0
        %v704 = vmax.f32 %v584, 0.0
        %v705 = vmax.f32 %v586, 0.0
        %v706 = vmax.f32 %v590, 0.0
        %v707 = vmax.f32 %v592, 0.0
        %v708 = vmax.f32 %v594, 0.0
        %v709 = vmax.f32 %v596, 0.0
        %v710 = vmax.f32 %v600, 0.0
        %v711 = vmax.f32 %v602, 0.0
        %v712 = vmax.f32 %v604, 0.0
        %v713 = vmax.f32 %v606, 0.0
        %v714 = vmax.f32 %v610, 0.0
        %v715 = vmax.f32 %v612, 0.0
        %v716 = vmax.f32 %v614, 0.0
        %v717 = vmax.f32 %v616, 0.0
        %v718 = vmax.f32 %v620, 0.0
        %v719 = vmax.f32 %v622, 0.0
        %v720 = vmax.f32 %v624, 0.0
        %v721 = vmax.f32 %v626, 0.0
        %v722 = vmax.f32 %v630, 0.0
        %v723 = vmax.f32 %v632, 0.0
        %v724 = vmax.f32 %v634, 0.0
        %v725 = vmax.f32 %v636, 0.0
        %v726 = vmax.f32 %v640, 0.0
        %v727 = vmax.f32 %v642, 0.0
        %v728 = vmax.f32 %v644, 0.0
        %v729 = vmax.f32 %v646, 0.0
        %v730 = vmax.f32 %v650, 0.0
        %v731 = vmax.f32 %v652, 0.0
        %v732 = vmax.f32 %v654, 0.0
        %v733 = vmax.f32 %v656, 0.0
        %v734 = vmax.f32 %v660, 0.0
        %v735 = vmax.f32 %v662, 0.0
        %v736 = vmax.f32 %v664, 0.0
        %v737 = vmax.f32 %v666, 0.0
        %v738 = vmax.f32 %v670, 0.0
        %v739 = vmax.f32 %v672, 0.0
        %v740 = vmax.f32 %v674, 0.0
        %v741 = vmax.f32 %v676, 0.0
        %v742 = vpack.c.bf16 %v680, %v678
        %v743 = vpack.c.bf16 %v681, %v679
        %v744 = vpack.c.bf16 %v684, %v682
        %v745 = vpack.c.bf16 %v685, %v683
        %v746 = vpack.c.bf16 %v688, %v686
        %v747 = vpack.c.bf16 %v689, %v687
        %v748 = vpack.c.bf16 %v692, %v690
        %v749 = vpack.c.bf16 %v693, %v691
        %v750 = vpack.c.bf16 %v696, %v694
        %v751 = vpack.c.bf16 %v697, %v695
        %v752 = vpack.c.bf16 %v700, %v698
        %v753 = vpack.c.bf16 %v701, %v699
        %v754 = vpack.c.bf16 %v704, %v702
        %v755 = vpack.c.bf16 %v705, %v703
        %v756 = vpack.c.bf16 %v708, %v706
        %v757 = vpack.c.bf16 %v709, %v707
        %v758 = vpack.c.bf16 %v712, %v710
        %v759 = vpack.c.bf16 %v713, %v711
        %v760 = vpack.c.bf16 %v716, %v714
        %v761 = vpack.c.bf16 %v717, %v715
        %v762 = vpack.c.bf16 %v720, %v718
        %v763 = vpack.c.bf16 %v721, %v719
        %v764 = vpack.c.bf16 %v724, %v722
        %v765 = vpack.c.bf16 %v725, %v723
        %v766 = vpack.c.bf16 %v728, %v726
        %v767 = vpack.c.bf16 %v729, %v727
        %v768 = vpack.c.bf16 %v732, %v730
        %v769 = vpack.c.bf16 %v733, %v731
        %v770 = vpack.c.bf16 %v736, %v734
        %v771 = vpack.c.bf16 %v737, %v735
        %v772 = vpack.c.bf16 %v740, %v738
        %v773 = vpack.c.bf16 %v741, %v739
        %v774 = vld [vmem:[#allocation7] sm:$0xf]
        %v775 = vld [vmem:[#allocation7 + $0x4] sm:$0xf]
        %v776 = vld [vmem:[#allocation7 + $0x8] sm:$0xf]
        %v777 = vld [vmem:[#allocation7 + $0xc] sm:$0xf]
        %v778 = vld [vmem:[#allocation7 + $0x10] sm:$0xf]
        %v779 = vld [vmem:[#allocation7 + $0x14] sm:$0xf]
        %v780 = vld [vmem:[#allocation7 + $0x18] sm:$0xf]
        %v781 = vld [vmem:[#allocation7 + $0x1c] sm:$0xf]
        %v782 = vld [vmem:[#allocation7 + $0x20] sm:$0xf]
        %v783 = vld [vmem:[#allocation7 + $0x24] sm:$0xf]
        %v784 = vld [vmem:[#allocation7 + $0x28] sm:$0xf]
        %v785 = vld [vmem:[#allocation7 + $0x2c] sm:$0xf]
        %v786 = vld [vmem:[#allocation7 + $0x30] sm:$0xf]
        %v787 = vld [vmem:[#allocation7 + $0x34] sm:$0xf]
        %v788 = vld [vmem:[#allocation7 + $0x38] sm:$0xf]
        %v789 = vld [vmem:[#allocation7 + $0x3c] sm:$0xf]
        %v790 = vld [vmem:[#allocation7 + $0x40] sm:$0xf]
        %v791 = vld [vmem:[#allocation7 + $0x44] sm:$0xf]
        %v792 = vld [vmem:[#allocation7 + $0x48] sm:$0xf]
        %v793 = vld [vmem:[#allocation7 + $0x4c] sm:$0xf]
        %v794 = vld [vmem:[#allocation7 + $0x50] sm:$0xf]
        %v795 = vld [vmem:[#allocation7 + $0x54] sm:$0xf]
        %v796 = vld [vmem:[#allocation7 + $0x58] sm:$0xf]
        %v797 = vld [vmem:[#allocation7 + $0x5c] sm:$0xf]
        %v798 = vld [vmem:[#allocation7 + $0x60] sm:$0xf]
        %v799 = vld [vmem:[#allocation7 + $0x64] sm:$0xf]
        %v800 = vld [vmem:[#allocation7 + $0x68] sm:$0xf]
        %v801 = vld [vmem:[#allocation7 + $0x6c] sm:$0xf]
        %v802 = vld [vmem:[#allocation7 + $0x70] sm:$0xf]
        %v803 = vld [vmem:[#allocation7 + $0x74] sm:$0xf]
        %v804 = vld [vmem:[#allocation7 + $0x78] sm:$0xf]
        %v805 = vld [vmem:[#allocation7 + $0x7c] sm:$0xf]
        %v806 = vld [vmem:[%s4] sm:$0x1]
        %v808 = vlaneseq
        %v809 = vshrl.u32 %v808, 7
        %v810 = vsub.s32 0, %v809
        %v811 = vrot.slane %v806, %v810
        %v845 = vunpack.c.l.b16 %v774
        %v846 = vunpack.c.l.b16 %v775
        %v847 = vunpack.c.l.b16 %v776
        %v848 = vunpack.c.l.b16 %v777
        %v849 = vunpack.c.l.b16 %v778
        %v850 = vunpack.c.l.b16 %v779
        %v851 = vunpack.c.l.b16 %v780
        %v852 = vunpack.c.l.b16 %v781
        %v853 = vunpack.c.l.b16 %v782
        %v854 = vunpack.c.l.b16 %v783
        %v855 = vunpack.c.l.b16 %v784
        %v856 = vunpack.c.l.b16 %v785
        %v857 = vunpack.c.l.b16 %v786
        %v858 = vunpack.c.l.b16 %v787
        %v859 = vunpack.c.l.b16 %v788
        %v860 = vunpack.c.l.b16 %v789
        %v861 = vunpack.c.l.b16 %v790
        %v862 = vunpack.c.l.b16 %v791
        %v863 = vunpack.c.l.b16 %v792
        %v864 = vunpack.c.l.b16 %v793
        %v865 = vunpack.c.l.b16 %v794
        %v866 = vunpack.c.l.b16 %v795
        %v867 = vunpack.c.l.b16 %v796
        %v868 = vunpack.c.l.b16 %v797
        %v869 = vunpack.c.l.b16 %v798
        %v870 = vunpack.c.l.b16 %v799
        %v871 = vunpack.c.l.b16 %v800
        %v872 = vunpack.c.l.b16 %v801
        %v873 = vunpack.c.l.b16 %v802
        %v874 = vunpack.c.l.b16 %v803
        %v875 = vunpack.c.l.b16 %v804
        %v876 = vunpack.c.l.b16 %v805
        %v877 = vpack.c.b16 %v846, %v845
        %v878 = vpack.c.b16 %v848, %v847
        %v879 = vpack.c.b16 %v850, %v849
        %v880 = vpack.c.b16 %v852, %v851
        %v881 = vpack.c.b16 %v854, %v853
        %v882 = vpack.c.b16 %v856, %v855
        %v883 = vpack.c.b16 %v858, %v857
        %v884 = vpack.c.b16 %v860, %v859
        %v885 = vpack.c.b16 %v862, %v861
        %v886 = vpack.c.b16 %v864, %v863
        %v887 = vpack.c.b16 %v866, %v865
        %v888 = vpack.c.b16 %v868, %v867
        %v889 = vpack.c.b16 %v870, %v869
        %v890 = vpack.c.b16 %v872, %v871
        %v891 = vpack.c.b16 %v874, %v873
        %v892 = vpack.c.b16 %v876, %v875
        %909 = vmatprep.subr.bf16.mxu0 0
        %910 = vmatpush1.bf16.msra.mxu0 %v877
        %911 = vmatprep.subr.bf16.mxu0 0
        %912 = vmatpush1.bf16.msra.mxu0 %v878
        %913 = vmatprep.subr.bf16.mxu0 0
        %914 = vmatpush1.bf16.msra.mxu0 %v879
        %915 = vmatprep.subr.bf16.mxu0 0
        %916 = vmatpush1.bf16.msra.mxu0 %v880
        %917 = vmatprep.subr.bf16.mxu0 0
        %918 = vmatpush1.bf16.msra.mxu0 %v881
        %919 = vmatprep.subr.bf16.mxu0 0
        %920 = vmatpush1.bf16.msra.mxu0 %v882
        %921 = vmatprep.subr.bf16.mxu0 0
        %922 = vmatpush1.bf16.msra.mxu0 %v883
        %923 = vmatprep.subr.bf16.mxu0 0
        %924 = vmatpush1.bf16.msra.mxu0 %v884
        %925 = vmatprep.subr.bf16.mxu0 0
        %926 = vmatpush1.bf16.msra.mxu0 %v885
        %927 = vmatprep.subr.bf16.mxu0 0
        %928 = vmatpush1.bf16.msra.mxu0 %v886
        %929 = vmatprep.subr.bf16.mxu0 0
        %930 = vmatpush1.bf16.msra.mxu0 %v887
        %931 = vmatprep.subr.bf16.mxu0 0
        %932 = vmatpush1.bf16.msra.mxu0 %v888
        %933 = vmatprep.subr.bf16.mxu0 0
        %934 = vmatpush1.bf16.msra.mxu0 %v889
        %935 = vmatprep.subr.bf16.mxu0 0
        %936 = vmatpush1.bf16.msra.mxu0 %v890
        %937 = vmatprep.subr.bf16.mxu0 0
        %938 = vmatpush1.bf16.msra.mxu0 %v891
        %939 = vmatprep.subr.bf16.mxu0 0
        %940 = vmatpush1.bf16.msra.mxu0 %v892
        %941 = vmatprep.mubr.bf16.mxu0 %v743
        %942 = vmatmul.mubr.bf16.gmra.mrb[0].mxu0 %v742
        %v943 = vpop.f32.mrb[0].mxu0
        %v944 = vadd.f32 %v811, %v943
        %v945 = vpop.f32.mrb[0].mxu0
        %v946 = vpop.f32.mrb[0].mxu0
        %v947 = vadd.f32 %v811, %v946
        %v948 = vpop.f32.mrb[0].mxu0
        %949 = vmatprep.mubr.bf16.mxu0 %v745
        %950 = vmatmul.mubr.bf16.gmra.mrb[0].mxu0 %v744
        %v951 = vpop.f32.mrb[0].mxu0
        %v952 = vadd.f32 %v811, %v951
        %v953 = vpop.f32.mrb[0].mxu0
        %v954 = vpop.f32.mrb[0].mxu0
        %v955 = vadd.f32 %v811, %v954
        %v956 = vpop.f32.mrb[0].mxu0
        %957 = vmatprep.mubr.bf16.mxu0 %v747
        %958 = vmatmul.mubr.bf16.gmra.mrb[0].mxu0 %v746
        %v959 = vpop.f32.mrb[0].mxu0
        %v960 = vadd.f32 %v811, %v959
        %v961 = vpop.f32.mrb[0].mxu0
        %v962 = vpop.f32.mrb[0].mxu0
        %v963 = vadd.f32 %v811, %v962
        %v964 = vpop.f32.mrb[0].mxu0
        %965 = vmatprep.mubr.bf16.mxu0 %v749
        %966 = vmatmul.mubr.bf16.gmra.mrb[0].mxu0 %v748
        %v967 = vpop.f32.mrb[0].mxu0
        %v968 = vadd.f32 %v811, %v967
        %v969 = vpop.f32.mrb[0].mxu0
        %v970 = vpop.f32.mrb[0].mxu0
        %v971 = vadd.f32 %v811, %v970
        %v972 = vpop.f32.mrb[0].mxu0
        %973 = vmatprep.mubr.bf16.mxu0 %v751
        %974 = vmatmul.mubr.bf16.gmra.mrb[0].mxu0 %v750
        %v975 = vpop.f32.mrb[0].mxu0
        %v976 = vadd.f32 %v811, %v975
        %v977 = vpop.f32.mrb[0].mxu0
        %v978 = vpop.f32.mrb[0].mxu0
        %v979 = vadd.f32 %v811, %v978
        %v980 = vpop.f32.mrb[0].mxu0
        %981 = vmatprep.mubr.bf16.mxu0 %v753
        %982 = vmatmul.mubr.bf16.gmra.mrb[0].mxu0 %v752
        %v983 = vpop.f32.mrb[0].mxu0
        %v984 = vadd.f32 %v811, %v983
        %v985 = vpop.f32.mrb[0].mxu0
        %v986 = vpop.f32.mrb[0].mxu0
        %v987 = vadd.f32 %v811, %v986
        %v988 = vpop.f32.mrb[0].mxu0
        %989 = vmatprep.mubr.bf16.mxu0 %v755
        %990 = vmatmul.mubr.bf16.gmra.mrb[0].mxu0 %v754
        %v991 = vpop.f32.mrb[0].mxu0
        %v992 = vadd.f32 %v811, %v991
        %v993 = vpop.f32.mrb[0].mxu0
        %v994 = vpop.f32.mrb[0].mxu0
        %v995 = vadd.f32 %v811, %v994
        %v996 = vpop.f32.mrb[0].mxu0
        %997 = vmatprep.mubr.bf16.mxu0 %v757
        %998 = vmatmul.mubr.bf16.gmra.mrb[0].mxu0 %v756
        %v999 = vpop.f32.mrb[0].mxu0
        %v1000 = vadd.f32 %v811, %v999
        %v1001 = vpop.f32.mrb[0].mxu0
        %v1002 = vpop.f32.mrb[0].mxu0
        %v1003 = vadd.f32 %v811, %v1002
        %v1004 = vpop.f32.mrb[0].mxu0
        %1005 = vmatprep.mubr.bf16.mxu0 %v759
        %1006 = vmatmul.mubr.bf16.gmra.mrb[0].mxu0 %v758
        %v1007 = vpop.f32.mrb[0].mxu0
        %v1008 = vadd.f32 %v811, %v1007
        %v1009 = vpop.f32.mrb[0].mxu0
        %v1010 = vpop.f32.mrb[0].mxu0
        %v1011 = vadd.f32 %v811, %v1010
        %v1012 = vpop.f32.mrb[0].mxu0
        %1013 = vmatprep.mubr.bf16.mxu0 %v761
        %1014 = vmatmul.mubr.bf16.gmra.mrb[0].mxu0 %v760
        %v1015 = vpop.f32.mrb[0].mxu0
        %v1016 = vadd.f32 %v811, %v1015
        %v1017 = vpop.f32.mrb[0].mxu0
        %v1018 = vpop.f32.mrb[0].mxu0
        %v1019 = vadd.f32 %v811, %v1018
        %v1020 = vpop.f32.mrb[0].mxu0
        %1021 = vmatprep.mubr.bf16.mxu0 %v763
        %1022 = vmatmul.mubr.bf16.gmra.mrb[0].mxu0 %v762
        %v1023 = vpop.f32.mrb[0].mxu0
        %v1024 = vadd.f32 %v811, %v1023
        %v1025 = vpop.f32.mrb[0].mxu0
        %v1026 = vpop.f32.mrb[0].mxu0
        %v1027 = vadd.f32 %v811, %v1026
        %v1028 = vpop.f32.mrb[0].mxu0
        %1029 = vmatprep.mubr.bf16.mxu0 %v765
        %1030 = vmatmul.mubr.bf16.gmra.mrb[0].mxu0 %v764
        %v1031 = vpop.f32.mrb[0].mxu0
        %v1032 = vadd.f32 %v811, %v1031
        %v1033 = vpop.f32.mrb[0].mxu0
        %v1034 = vpop.f32.mrb[0].mxu0
        %v1035 = vadd.f32 %v811, %v1034
        %v1036 = vpop.f32.mrb[0].mxu0
        %1037 = vmatprep.mubr.bf16.mxu0 %v767
        %1038 = vmatmul.mubr.bf16.gmra.mrb[0].mxu0 %v766
        %v1039 = vpop.f32.mrb[0].mxu0
        %v1040 = vadd.f32 %v811, %v1039
        %v1041 = vpop.f32.mrb[0].mxu0
        %v1042 = vpop.f32.mrb[0].mxu0
        %v1043 = vadd.f32 %v811, %v1042
        %v1044 = vpop.f32.mrb[0].mxu0
        %1045 = vmatprep.mubr.bf16.mxu0 %v769
        %1046 = vmatmul.mubr.bf16.gmra.mrb[0].mxu0 %v768
        %v1047 = vpop.f32.mrb[0].mxu0
        %v1048 = vadd.f32 %v811, %v1047
        %v1049 = vpop.f32.mrb[0].mxu0
        %v1050 = vpop.f32.mrb[0].mxu0
        %v1051 = vadd.f32 %v811, %v1050
        %v1052 = vpop.f32.mrb[0].mxu0
        %1053 = vmatprep.mubr.bf16.mxu0 %v771
        %1054 = vmatmul.mubr.bf16.gmra.mrb[0].mxu0 %v770
        %v1055 = vpop.f32.mrb[0].mxu0
        %v1056 = vadd.f32 %v811, %v1055
        %v1057 = vpop.f32.mrb[0].mxu0
        %v1058 = vpop.f32.mrb[0].mxu0
        %v1059 = vadd.f32 %v811, %v1058
        %v1060 = vpop.f32.mrb[0].mxu0
        %1061 = vmatprep.mubr.bf16.mxu0 %v773
        %1062 = vmatmul.mubr.bf16.gmra.mrb[0].mxu0 %v772
        %v1063 = vpop.f32.mrb[0].mxu0
        %v1064 = vadd.f32 %v811, %v1063
        %v1065 = vpop.f32.mrb[0].mxu0
        %v1066 = vpop.f32.mrb[0].mxu0
        %v1067 = vadd.f32 %v811, %v1066
        %v1068 = vpop.f32.mrb[0].mxu0
        %1069 = vdwg.mxu0
        %v1070 = vadd.f32 %v329, %v944
        %v1071 = vadd.f32 %v330, %v947
        %v1072 = vadd.f32 %v331, %v952
        %v1073 = vadd.f32 %v332, %v955
        %v1074 = vadd.f32 %v333, %v960
        %v1075 = vadd.f32 %v334, %v963
        %v1076 = vadd.f32 %v335, %v968
        %v1077 = vadd.f32 %v336, %v971
        %v1078 = vadd.f32 %v337, %v976
        %v1079 = vadd.f32 %v338, %v979
        %v1080 = vadd.f32 %v339, %v984
        %v1081 = vadd.f32 %v340, %v987
        %v1082 = vadd.f32 %v341, %v992
        %v1083 = vadd.f32 %v342, %v995
        %v1084 = vadd.f32 %v343, %v1000
        %v1085 = vadd.f32 %v344, %v1003
        %v1086 = vadd.f32 %v345, %v1008
        %v1087 = vadd.f32 %v346, %v1011
        %v1088 = vadd.f32 %v347, %v1016
        %v1089 = vadd.f32 %v348, %v1019
        %v1090 = vadd.f32 %v349, %v1024
        %v1091 = vadd.f32 %v350, %v1027
        %v1092 = vadd.f32 %v351, %v1032
        %v1093 = vadd.f32 %v352, %v1035
        %v1094 = vadd.f32 %v353, %v1040
        %v1095 = vadd.f32 %v354, %v1043
        %v1096 = vadd.f32 %v355, %v1048
        %v1097 = vadd.f32 %v356, %v1051
        %v1098 = vadd.f32 %v357, %v1056
        %v1099 = vadd.f32 %v358, %v1059
        %v1100 = vadd.f32 %v359, %v1064
        %v1101 = vadd.f32 %v360, %v1067
        %1102 = vadd.xlane.f32.xlu0 %v1070
        %v1103 = vpop.xlane.xlu0 %1102
        %1104 = vadd.xlane.f32.xlu0 %v1071
        %v1105 = vpop.xlane.xlu0 %1104
        %1106 = vadd.xlane.f32.xlu0 %v1072
        %v1107 = vpop.xlane.xlu0 %1106
        %1108 = vadd.xlane.f32.xlu0 %v1073
        %v1109 = vpop.xlane.xlu0 %1108
        %1110 = vadd.xlane.f32.xlu0 %v1074
        %v1111 = vpop.xlane.xlu0 %1110
        %1112 = vadd.xlane.f32.xlu0 %v1075
        %v1113 = vpop.xlane.xlu0 %1112
        %1114 = vadd.xlane.f32.xlu0 %v1076
        %v1115 = vpop.xlane.xlu0 %1114
        %1116 = vadd.xlane.f32.xlu0 %v1077
        %v1117 = vpop.xlane.xlu0 %1116
        %1118 = vadd.xlane.f32.xlu0 %v1078
        %v1119 = vpop.xlane.xlu0 %1118
        %1120 = vadd.xlane.f32.xlu0 %v1079
        %v1121 = vpop.xlane.xlu0 %1120
        %1122 = vadd.xlane.f32.xlu0 %v1080
        %v1123 = vpop.xlane.xlu0 %1122
        %1124 = vadd.xlane.f32.xlu0 %v1081
        %v1125 = vpop.xlane.xlu0 %1124
        %1126 = vadd.xlane.f32.xlu0 %v1082
        %v1127 = vpop.xlane.xlu0 %1126
        %1128 = vadd.xlane.f32.xlu0 %v1083
        %v1129 = vpop.xlane.xlu0 %1128
        %1130 = vadd.xlane.f32.xlu0 %v1084
        %v1131 = vpop.xlane.xlu0 %1130
        %1132 = vadd.xlane.f32.xlu0 %v1085
        %v1133 = vpop.xlane.xlu0 %1132
        %1134 = vadd.xlane.f32.xlu0 %v1086
        %v1135 = vpop.xlane.xlu0 %1134
        %1136 = vadd.xlane.f32.xlu0 %v1087
        %v1137 = vpop.xlane.xlu0 %1136
        %1138 = vadd.xlane.f32.xlu0 %v1088
        %v1139 = vpop.xlane.xlu0 %1138
        %1140 = vadd.xlane.f32.xlu0 %v1089
        %v1141 = vpop.xlane.xlu0 %1140
        %1142 = vadd.xlane.f32.xlu0 %v1090
        %v1143 = vpop.xlane.xlu0 %1142
        %1144 = vadd.xlane.f32.xlu0 %v1091
        %v1145 = vpop.xlane.xlu0 %1144
        %1146 = vadd.xlane.f32.xlu0 %v1092
        %v1147 = vpop.xlane.xlu0 %1146
        %1148 = vadd.xlane.f32.xlu0 %v1093
        %v1149 = vpop.xlane.xlu0 %1148
        %1150 = vadd.xlane.f32.xlu0 %v1094
        %v1151 = vpop.xlane.xlu0 %1150
        %1152 = vadd.xlane.f32.xlu0 %v1095
        %v1153 = vpop.xlane.xlu0 %1152
        %1154 = vadd.xlane.f32.xlu0 %v1096
        %v1155 = vpop.xlane.xlu0 %1154
        %1156 = vadd.xlane.f32.xlu0 %v1097
        %v1157 = vpop.xlane.xlu0 %1156
        %1158 = vadd.xlane.f32.xlu0 %v1098
        %v1159 = vpop.xlane.xlu0 %1158
        %1160 = vadd.xlane.f32.xlu0 %v1099
        %v1161 = vpop.xlane.xlu0 %1160
        %1162 = vadd.xlane.f32.xlu0 %v1100
        %v1163 = vpop.xlane.xlu0 %1162
        %1164 = vadd.xlane.f32.xlu0 %v1101
        %v1165 = vpop.xlane.xlu0 %1164
        %v1166 = vrcp.pop 128.0
        %v1167 = vmul.f32 %v1103, %v1166
        %v1168 = vmul.f32 %v1105, %v1166
        %v1169 = vmul.f32 %v1107, %v1166
        %v1170 = vmul.f32 %v1109, %v1166
        %v1171 = vmul.f32 %v1111, %v1166
        %v1172 = vmul.f32 %v1113, %v1166
        %v1173 = vmul.f32 %v1115, %v1166
        %v1174 = vmul.f32 %v1117, %v1166
        %v1175 = vmul.f32 %v1119, %v1166
        %v1176 = vmul.f32 %v1121, %v1166
        %v1177 = vmul.f32 %v1123, %v1166
        %v1178 = vmul.f32 %v1125, %v1166
        %v1179 = vmul.f32 %v1127, %v1166
        %v1180 = vmul.f32 %v1129, %v1166
        %v1181 = vmul.f32 %v1131, %v1166
        %v1182 = vmul.f32 %v1133, %v1166
        %v1183 = vmul.f32 %v1135, %v1166
        %v1184 = vmul.f32 %v1137, %v1166
        %v1185 = vmul.f32 %v1139, %v1166
        %v1186 = vmul.f32 %v1141, %v1166
        %v1187 = vmul.f32 %v1143, %v1166
        %v1188 = vmul.f32 %v1145, %v1166
        %v1189 = vmul.f32 %v1147, %v1166
        %v1190 = vmul.f32 %v1149, %v1166
        %v1191 = vmul.f32 %v1151, %v1166
        %v1192 = vmul.f32 %v1153, %v1166
        %v1193 = vmul.f32 %v1155, %v1166
        %v1194 = vmul.f32 %v1157, %v1166
        %v1195 = vmul.f32 %v1159, %v1166
        %v1196 = vmul.f32 %v1161, %v1166
        %v1197 = vmul.f32 %v1163, %v1166
        %v1198 = vmul.f32 %v1165, %v1166
        %v1199 = vsub.f32 %v1070, %v1167
        %v1200 = vsub.f32 %v1071, %v1168
        %v1201 = vsub.f32 %v1072, %v1169
        %v1202 = vsub.f32 %v1073, %v1170
        %v1203 = vsub.f32 %v1074, %v1171
        %v1204 = vsub.f32 %v1075, %v1172
        %v1205 = vsub.f32 %v1076, %v1173
        %v1206 = vsub.f32 %v1077, %v1174
        %v1207 = vsub.f32 %v1078, %v1175
        %v1208 = vsub.f32 %v1079, %v1176
        %v1209 = vsub.f32 %v1080, %v1177
        %v1210 = vsub.f32 %v1081, %v1178
        %v1211 = vsub.f32 %v1082, %v1179
        %v1212 = vsub.f32 %v1083, %v1180
        %v1213 = vsub.f32 %v1084, %v1181
        %v1214 = vsub.f32 %v1085, %v1182
        %v1215 = vsub.f32 %v1086, %v1183
        %v1216 = vsub.f32 %v1087, %v1184
        %v1217 = vsub.f32 %v1088, %v1185
        %v1218 = vsub.f32 %v1089, %v1186
        %v1219 = vsub.f32 %v1090, %v1187
        %v1220 = vsub.f32 %v1091, %v1188
        %v1221 = vsub.f32 %v1092, %v1189
        %v1222 = vsub.f32 %v1093, %v1190
        %v1223 = vsub.f32 %v1094, %v1191
        %v1224 = vsub.f32 %v1095, %v1192
        %v1225 = vsub.f32 %v1096, %v1193
        %v1226 = vsub.f32 %v1097, %v1194
        %v1227 = vsub.f32 %v1098, %v1195
        %v1228 = vsub.f32 %v1099, %v1196
        %v1229 = vsub.f32 %v1100, %v1197
        %v1230 = vsub.f32 %v1101, %v1198
        %v1231 = vmul.f32 %v1199, %v1199
        %v1232 = vmul.f32 %v1200, %v1200
        %v1233 = vmul.f32 %v1201, %v1201
        %v1234 = vmul.f32 %v1202, %v1202
        %v1235 = vmul.f32 %v1203, %v1203
        %v1236 = vmul.f32 %v1204, %v1204
        %v1237 = vmul.f32 %v1205, %v1205
        %v1238 = vmul.f32 %v1206, %v1206
        %v1239 = vmul.f32 %v1207, %v1207
        %v1240 = vmul.f32 %v1208, %v1208
        %v1241 = vmul.f32 %v1209, %v1209
        %v1242 = vmul.f32 %v1210, %v1210
        %v1243 = vmul.f32 %v1211, %v1211
        %v1244 = vmul.f32 %v1212, %v1212
        %v1245 = vmul.f32 %v1213, %v1213
        %v1246 = vmul.f32 %v1214, %v1214
        %v1247 = vmul.f32 %v1215, %v1215
        %v1248 = vmul.f32 %v1216, %v1216
        %v1249 = vmul.f32 %v1217, %v1217
        %v1250 = vmul.f32 %v1218, %v1218
        %v1251 = vmul.f32 %v1219, %v1219
        %v1252 = vmul.f32 %v1220, %v1220
        %v1253 = vmul.f32 %v1221, %v1221
        %v1254 = vmul.f32 %v1222, %v1222
        %v1255 = vmul.f32 %v1223, %v1223
        %v1256 = vmul.f32 %v1224, %v1224
        %v1257 = vmul.f32 %v1225, %v1225
        %v1258 = vmul.f32 %v1226, %v1226
        %v1259 = vmul.f32 %v1227, %v1227
        %v1260 = vmul.f32 %v1228, %v1228
        %v1261 = vmul.f32 %v1229, %v1229
        %v1262 = vmul.f32 %v1230, %v1230
        %1263 = vadd.xlane.f32.xlu0 %v1231
        %v1264 = vpop.xlane.xlu0 %1263
        %1265 = vadd.xlane.f32.xlu0 %v1232
        %v1266 = vpop.xlane.xlu0 %1265
        %1267 = vadd.xlane.f32.xlu0 %v1233
        %v1268 = vpop.xlane.xlu0 %1267
        %1269 = vadd.xlane.f32.xlu0 %v1234
        %v1270 = vpop.xlane.xlu0 %1269
        %1271 = vadd.xlane.f32.xlu0 %v1235
        %v1272 = vpop.xlane.xlu0 %1271
        %1273 = vadd.xlane.f32.xlu0 %v1236
        %v1274 = vpop.xlane.xlu0 %1273
        %1275 = vadd.xlane.f32.xlu0 %v1237
        %v1276 = vpop.xlane.xlu0 %1275
        %1277 = vadd.xlane.f32.xlu0 %v1238
        %v1278 = vpop.xlane.xlu0 %1277
        %1279 = vadd.xlane.f32.xlu0 %v1239
        %v1280 = vpop.xlane.xlu0 %1279
        %1281 = vadd.xlane.f32.xlu0 %v1240
        %v1282 = vpop.xlane.xlu0 %1281
        %1283 = vadd.xlane.f32.xlu0 %v1241
        %v1284 = vpop.xlane.xlu0 %1283
        %1285 = vadd.xlane.f32.xlu0 %v1242
        %v1286 = vpop.xlane.xlu0 %1285
        %1287 = vadd.xlane.f32.xlu0 %v1243
        %v1288 = vpop.xlane.xlu0 %1287
        %1289 = vadd.xlane.f32.xlu0 %v1244
        %v1290 = vpop.xlane.xlu0 %1289
        %1291 = vadd.xlane.f32.xlu0 %v1245
        %v1292 = vpop.xlane.xlu0 %1291
        %1293 = vadd.xlane.f32.xlu0 %v1246
        %v1294 = vpop.xlane.xlu0 %1293
        %1295 = vadd.xlane.f32.xlu0 %v1247
        %v1296 = vpop.xlane.xlu0 %1295
        %1297 = vadd.xlane.f32.xlu0 %v1248
        %v1298 = vpop.xlane.xlu0 %1297
        %1299 = vadd.xlane.f32.xlu0 %v1249
        %v1300 = vpop.xlane.xlu0 %1299
        %1301 = vadd.xlane.f32.xlu0 %v1250
        %v1302 = vpop.xlane.xlu0 %1301
        %1303 = vadd.xlane.f32.xlu0 %v1251
        %v1304 = vpop.xlane.xlu0 %1303
        %1305 = vadd.xlane.f32.xlu0 %v1252
        %v1306 = vpop.xlane.xlu0 %1305
        %1307 = vadd.xlane.f32.xlu0 %v1253
        %v1308 = vpop.xlane.xlu0 %1307
        %1309 = vadd.xlane.f32.xlu0 %v1254
        %v1310 = vpop.xlane.xlu0 %1309
        %1311 = vadd.xlane.f32.xlu0 %v1255
        %v1312 = vpop.xlane.xlu0 %1311
        %1313 = vadd.xlane.f32.xlu0 %v1256
        %v1314 = vpop.xlane.xlu0 %1313
        %1315 = vadd.xlane.f32.xlu0 %v1257
        %v1316 = vpop.xlane.xlu0 %1315
        %1317 = vadd.xlane.f32.xlu0 %v1258
        %v1318 = vpop.xlane.xlu0 %1317
        %1319 = vadd.xlane.f32.xlu0 %v1259
        %v1320 = vpop.xlane.xlu0 %1319
        %1321 = vadd.xlane.f32.xlu0 %v1260
        %v1322 = vpop.xlane.xlu0 %1321
        %1323 = vadd.xlane.f32.xlu0 %v1261
        %v1324 = vpop.xlane.xlu0 %1323
        %1325 = vadd.xlane.f32.xlu0 %v1262
        %v1326 = vpop.xlane.xlu0 %1325
        %v1327 = vmul.f32 %v1264, %v1166
        %v1328 = vmul.f32 %v1266, %v1166
        %v1329 = vmul.f32 %v1268, %v1166
        %v1330 = vmul.f32 %v1270, %v1166
        %v1331 = vmul.f32 %v1272, %v1166
        %v1332 = vmul.f32 %v1274, %v1166
        %v1333 = vmul.f32 %v1276, %v1166
        %v1334 = vmul.f32 %v1278, %v1166
        %v1335 = vmul.f32 %v1280, %v1166
        %v1336 = vmul.f32 %v1282, %v1166
        %v1337 = vmul.f32 %v1284, %v1166
        %v1338 = vmul.f32 %v1286, %v1166
        %v1339 = vmul.f32 %v1288, %v1166
        %v1340 = vmul.f32 %v1290, %v1166
        %v1341 = vmul.f32 %v1292, %v1166
        %v1342 = vmul.f32 %v1294, %v1166
        %v1343 = vmul.f32 %v1296, %v1166
        %v1344 = vmul.f32 %v1298, %v1166
        %v1345 = vmul.f32 %v1300, %v1166
        %v1346 = vmul.f32 %v1302, %v1166
        %v1347 = vmul.f32 %v1304, %v1166
        %v1348 = vmul.f32 %v1306, %v1166
        %v1349 = vmul.f32 %v1308, %v1166
        %v1350 = vmul.f32 %v1310, %v1166
        %v1351 = vmul.f32 %v1312, %v1166
        %v1352 = vmul.f32 %v1314, %v1166
        %v1353 = vmul.f32 %v1316, %v1166
        %v1354 = vmul.f32 %v1318, %v1166
        %v1355 = vmul.f32 %v1320, %v1166
        %v1356 = vmul.f32 %v1322, %v1166
        %v1357 = vmul.f32 %v1324, %v1166
        %v1358 = vmul.f32 %v1326, %v1166
        %v1359 = vadd.f32 %v1327, 1e-05
        %v1360 = vadd.f32 %v1328, 1e-05
        %v1361 = vadd.f32 %v1329, 1e-05
        %v1362 = vadd.f32 %v1330, 1e-05
        %v1363 = vadd.f32 %v1331, 1e-05
        %v1364 = vadd.f32 %v1332, 1e-05
        %v1365 = vadd.f32 %v1333, 1e-05
        %v1366 = vadd.f32 %v1334, 1e-05
        %v1367 = vadd.f32 %v1335, 1e-05
        %v1368 = vadd.f32 %v1336, 1e-05
        %v1369 = vadd.f32 %v1337, 1e-05
        %v1370 = vadd.f32 %v1338, 1e-05
        %v1371 = vadd.f32 %v1339, 1e-05
        %v1372 = vadd.f32 %v1340, 1e-05
        %v1373 = vadd.f32 %v1341, 1e-05
        %v1374 = vadd.f32 %v1342, 1e-05
        %v1375 = vadd.f32 %v1343, 1e-05
        %v1376 = vadd.f32 %v1344, 1e-05
        %v1377 = vadd.f32 %v1345, 1e-05
        %v1378 = vadd.f32 %v1346, 1e-05
        %v1379 = vadd.f32 %v1347, 1e-05
        %v1380 = vadd.f32 %v1348, 1e-05
        %v1381 = vadd.f32 %v1349, 1e-05
        %v1382 = vadd.f32 %v1350, 1e-05
        %v1383 = vadd.f32 %v1351, 1e-05
        %v1384 = vadd.f32 %v1352, 1e-05
        %v1385 = vadd.f32 %v1353, 1e-05
        %v1386 = vadd.f32 %v1354, 1e-05
        %v1387 = vadd.f32 %v1355, 1e-05
        %v1388 = vadd.f32 %v1356, 1e-05
        %v1389 = vadd.f32 %v1357, 1e-05
        %v1390 = vadd.f32 %v1358, 1e-05
        %v1391 = vrsqrt.pop %v1359
        %v1392 = vrsqrt.pop %v1360
        %v1393 = vrsqrt.pop %v1361
        %v1394 = vrsqrt.pop %v1362
        %v1395 = vrsqrt.pop %v1363
        %v1396 = vrsqrt.pop %v1364
        %v1397 = vrsqrt.pop %v1365
        %v1398 = vrsqrt.pop %v1366
        %v1399 = vrsqrt.pop %v1367
        %v1400 = vrsqrt.pop %v1368
        %v1401 = vrsqrt.pop %v1369
        %v1402 = vrsqrt.pop %v1370
        %v1403 = vrsqrt.pop %v1371
        %v1404 = vrsqrt.pop %v1372
        %v1405 = vrsqrt.pop %v1373
        %v1406 = vrsqrt.pop %v1374
        %v1407 = vrsqrt.pop %v1375
        %v1408 = vrsqrt.pop %v1376
        %v1409 = vrsqrt.pop %v1377
        %v1410 = vrsqrt.pop %v1378
        %v1411 = vrsqrt.pop %v1379
        %v1412 = vrsqrt.pop %v1380
        %v1413 = vrsqrt.pop %v1381
        %v1414 = vrsqrt.pop %v1382
        %v1415 = vrsqrt.pop %v1383
        %v1416 = vrsqrt.pop %v1384
        %v1417 = vrsqrt.pop %v1385
        %v1418 = vrsqrt.pop %v1386
        %v1419 = vrsqrt.pop %v1387
        %v1420 = vrsqrt.pop %v1388
        %v1421 = vrsqrt.pop %v1389
        %v1422 = vrsqrt.pop %v1390
        %v1423 = vmul.f32 %v1199, %v1391
        %v1424 = vmul.f32 %v1200, %v1392
        %v1425 = vmul.f32 %v1201, %v1393
        %v1426 = vmul.f32 %v1202, %v1394
        %v1427 = vmul.f32 %v1203, %v1395
        %v1428 = vmul.f32 %v1204, %v1396
        %v1429 = vmul.f32 %v1205, %v1397
        %v1430 = vmul.f32 %v1206, %v1398
        %v1431 = vmul.f32 %v1207, %v1399
        %v1432 = vmul.f32 %v1208, %v1400
        %v1433 = vmul.f32 %v1209, %v1401
        %v1434 = vmul.f32 %v1210, %v1402
        %v1435 = vmul.f32 %v1211, %v1403
        %v1436 = vmul.f32 %v1212, %v1404
        %v1437 = vmul.f32 %v1213, %v1405
        %v1438 = vmul.f32 %v1214, %v1406
        %v1439 = vmul.f32 %v1215, %v1407
        %v1440 = vmul.f32 %v1216, %v1408
        %v1441 = vmul.f32 %v1217, %v1409
        %v1442 = vmul.f32 %v1218, %v1410
        %v1443 = vmul.f32 %v1219, %v1411
        %v1444 = vmul.f32 %v1220, %v1412
        %v1445 = vmul.f32 %v1221, %v1413
        %v1446 = vmul.f32 %v1222, %v1414
        %v1447 = vmul.f32 %v1223, %v1415
        %v1448 = vmul.f32 %v1224, %v1416
        %v1449 = vmul.f32 %v1225, %v1417
        %v1450 = vmul.f32 %v1226, %v1418
        %v1451 = vmul.f32 %v1227, %v1419
        %v1452 = vmul.f32 %v1228, %v1420
        %v1453 = vmul.f32 %v1229, %v1421
        %v1454 = vmul.f32 %v1230, %v1422
        %v1455 = vld [vmem:[%s5] sm:$0x1]
        %v1457 = vlaneseq
        %v1458 = vshrl.u32 %v1457, 7
        %v1459 = vsub.s32 0, %v1458
        %v1460 = vrot.slane %v1455, %v1459
        %v1462 = vmul.f32 %v1423, %v1460
        %v1463 = vmul.f32 %v1424, %v1460
        %v1464 = vmul.f32 %v1425, %v1460
        %v1465 = vmul.f32 %v1426, %v1460
        %v1466 = vmul.f32 %v1427, %v1460
        %v1467 = vmul.f32 %v1428, %v1460
        %v1468 = vmul.f32 %v1429, %v1460
        %v1469 = vmul.f32 %v1430, %v1460
        %v1470 = vmul.f32 %v1431, %v1460
        %v1471 = vmul.f32 %v1432, %v1460
        %v1472 = vmul.f32 %v1433, %v1460
        %v1473 = vmul.f32 %v1434, %v1460
        %v1474 = vmul.f32 %v1435, %v1460
        %v1475 = vmul.f32 %v1436, %v1460
        %v1476 = vmul.f32 %v1437, %v1460
        %v1477 = vmul.f32 %v1438, %v1460
        %v1478 = vmul.f32 %v1439, %v1460
        %v1479 = vmul.f32 %v1440, %v1460
        %v1480 = vmul.f32 %v1441, %v1460
        %v1481 = vmul.f32 %v1442, %v1460
        %v1482 = vmul.f32 %v1443, %v1460
        %v1483 = vmul.f32 %v1444, %v1460
        %v1484 = vmul.f32 %v1445, %v1460
        %v1485 = vmul.f32 %v1446, %v1460
        %v1486 = vmul.f32 %v1447, %v1460
        %v1487 = vmul.f32 %v1448, %v1460
        %v1488 = vmul.f32 %v1449, %v1460
        %v1489 = vmul.f32 %v1450, %v1460
        %v1490 = vmul.f32 %v1451, %v1460
        %v1491 = vmul.f32 %v1452, %v1460
        %v1492 = vmul.f32 %v1453, %v1460
        %v1493 = vmul.f32 %v1454, %v1460
        %v1494 = vld [vmem:[%s6] sm:$0x1]
        %v1496 = vlaneseq
        %v1497 = vshrl.u32 %v1496, 7
        %v1498 = vsub.s32 0, %v1497
        %v1499 = vrot.slane %v1494, %v1498
        %v1501 = vadd.f32 %v1462, %v1499
        %v1502 = vadd.f32 %v1463, %v1499
        %v1503 = vadd.f32 %v1464, %v1499
        %v1504 = vadd.f32 %v1465, %v1499
        %v1505 = vadd.f32 %v1466, %v1499
        %v1506 = vadd.f32 %v1467, %v1499
        %v1507 = vadd.f32 %v1468, %v1499
        %v1508 = vadd.f32 %v1469, %v1499
        %v1509 = vadd.f32 %v1470, %v1499
        %v1510 = vadd.f32 %v1471, %v1499
        %v1511 = vadd.f32 %v1472, %v1499
        %v1512 = vadd.f32 %v1473, %v1499
        %v1513 = vadd.f32 %v1474, %v1499
        %v1514 = vadd.f32 %v1475, %v1499
        %v1515 = vadd.f32 %v1476, %v1499
        %v1516 = vadd.f32 %v1477, %v1499
        %v1517 = vadd.f32 %v1478, %v1499
        %v1518 = vadd.f32 %v1479, %v1499
        %v1519 = vadd.f32 %v1480, %v1499
        %v1520 = vadd.f32 %v1481, %v1499
        %v1521 = vadd.f32 %v1482, %v1499
        %v1522 = vadd.f32 %v1483, %v1499
        %v1523 = vadd.f32 %v1484, %v1499
        %v1524 = vadd.f32 %v1485, %v1499
        %v1525 = vadd.f32 %v1486, %v1499
        %v1526 = vadd.f32 %v1487, %v1499
        %v1527 = vadd.f32 %v1488, %v1499
        %v1528 = vadd.f32 %v1489, %v1499
        %v1529 = vadd.f32 %v1490, %v1499
        %v1530 = vadd.f32 %v1491, %v1499
        %v1531 = vadd.f32 %v1492, %v1499
        %v1532 = vadd.f32 %v1493, %v1499
        %1533 = vst [vmem:[%s325] sm:$0xff] %v1501
        %1534 = vst [vmem:[%s325 + $0x8] sm:$0xff] %v1502
        %1535 = vst [vmem:[%s325 + $0x10] sm:$0xff] %v1503
        %1536 = vst [vmem:[%s325 + $0x18] sm:$0xff] %v1504
        %1537 = vst [vmem:[%s325 + $0x20] sm:$0xff] %v1505
        %1538 = vst [vmem:[%s325 + $0x28] sm:$0xff] %v1506
        %1539 = vst [vmem:[%s325 + $0x30] sm:$0xff] %v1507
        %1540 = vst [vmem:[%s325 + $0x38] sm:$0xff] %v1508
        %1541 = vst [vmem:[%s325 + $0x40] sm:$0xff] %v1509
        %1542 = vst [vmem:[%s325 + $0x48] sm:$0xff] %v1510
        %1543 = vst [vmem:[%s325 + $0x50] sm:$0xff] %v1511
        %1544 = vst [vmem:[%s325 + $0x58] sm:$0xff] %v1512
        %1545 = vst [vmem:[%s325 + $0x60] sm:$0xff] %v1513
        %1546 = vst [vmem:[%s325 + $0x68] sm:$0xff] %v1514
        %1547 = vst [vmem:[%s325 + $0x70] sm:$0xff] %v1515
        %1548 = vst [vmem:[%s325 + $0x78] sm:$0xff] %v1516
        %1549 = vst [vmem:[%s325 + $0x80] sm:$0xff] %v1517
        %1550 = vst [vmem:[%s325 + $0x88] sm:$0xff] %v1518
        %1551 = vst [vmem:[%s325 + $0x90] sm:$0xff] %v1519
        %1552 = vst [vmem:[%s325 + $0x98] sm:$0xff] %v1520
        %1553 = vst [vmem:[%s325 + $0xa0] sm:$0xff] %v1521
        %1554 = vst [vmem:[%s325 + $0xa8] sm:$0xff] %v1522
        %1555 = vst [vmem:[%s325 + $0xb0] sm:$0xff] %v1523
        %1556 = vst [vmem:[%s325 + $0xb8] sm:$0xff] %v1524
        %1557 = vst [vmem:[%s325 + $0xc0] sm:$0xff] %v1525
        %1558 = vst [vmem:[%s325 + $0xc8] sm:$0xff] %v1526
        %1559 = vst [vmem:[%s325 + $0xd0] sm:$0xff] %v1527
        %1560 = vst [vmem:[%s325 + $0xd8] sm:$0xff] %v1528
        %1561 = vst [vmem:[%s325 + $0xe0] sm:$0xff] %v1529
        %1562 = vst [vmem:[%s325 + $0xe8] sm:$0xff] %v1530
        %1563 = vst [vmem:[%s325 + $0xf0] sm:$0xff] %v1531
        %1564 = vst [vmem:[%s325 + $0xf8] sm:$0xff] %v1532
        %s1565 = sand.u32 %s185, 1
        %s1566 = scalar_lea.sflag [#allocation4], %s1565
        %s1567 = sand.u32 %s185, 1
        %s1568 = smul.addr %s1567, 256
        %s1569 = scalar_lea.vmem [#allocation8], %s1568
        // Predicated region
        $region61: #{tpu_custom_call.1} parent=47 // pred_check
          %p1570 = pneg %p195
        $region62: #{tpu_custom_call.1} parent=47 // pred_check_branch
          %1572 = sbr.rel (%p1570) target = $region64
        $region63: #{tpu_custom_call.1} parent=47 // pred_region
          %s1573 = smul.u32 32, %s25
          %s1575 = ssub.s32 4096, 4096
          %1576 = vsyncadd %s1566, %s1575
          %s1577 = smul.addr %s1573, 128
          %s1578 = scalar_lea.hbm %s7, %s1577
          %s1579 = sshll.u32 %s1569, 4
          %s1580 = int_to_ptr.vmem [resolvable:$true] %s1579
          %1585 = dma.vmem_to_hbm [thread:$0]  %s1580, 4096, %s1578, %s1566, 128, 128, 8
        $region64: #{tpu_custom_call.1} parent=47 // pred_fallthru
          _
      $region48: #{tpu_custom_call.1} parent=5 // pred_fallthru
        _
      %p1586 = scmp.le.s32.totalorder 2, %s20
      // Predicated region
      $region65: #{tpu_custom_call.1} parent=5 // pred_check
        %p1587 = pneg %p1586
      $region66: #{tpu_custom_call.1} parent=5 // pred_check_branch
        %1589 = sbr.rel (%p1587) target = $region68
      $region67: #{tpu_custom_call.1} parent=5 // pred_region
        %s1590 = ssub.s32 %s20, 2
        // Predicated region
        $region69: #{tpu_custom_call.1} parent=67 // pred_check
          %p1591 = pneg %p201
        $region70: #{tpu_custom_call.1} parent=67 // pred_check_branch
          %1593 = sbr.rel (%p1591) target = $region72
        $region71: #{tpu_custom_call.1} parent=67 // pred_region
          %s1594 = sand.u32 %s186, 1
          %s1595 = scalar_lea.sflag [#allocation4], %s1594
          %s1596 = sand.u32 %s186, 1
          %s1597 = smul.addr %s1596, 256
          %s1598 = scalar_lea.vmem [#allocation8], %s1597
          %1599 = dma.done %s1595, 4096
        $region72: #{tpu_custom_call.1} parent=67 // pred_fallthru
          _
      $region68: #{tpu_custom_call.1} parent=5 // pred_fallthru
        _
    $region6: #{tpu_custom_call.1} parent=1 // loop_footer
      %s24 = sadd.s32 1, %s20
    $region7: #{tpu_custom_call.1} parent=1 // loop_footer_branch
      %19 = sbr.rel target = $region3
    $region8: #{tpu_custom_call.1} parent=1 // loop_exit
      _
    %1600 = vsyncpa [#allocation3], 1
    %s1601 = scalar_lea.sflag [#allocation3], 1
    %1602 = vsyncpa %s1601, 1
    %1603 = vsyncpa [#allocation6], 1
    %1604 = vsyncpa [#allocation4], 1
    %s1605 = scalar_lea.sflag [#allocation4], 1
    %1606 = vsyncpa %s1605, 1

</llo_original>
